<compile_context>
chip_gen: v7x
topology: tpu7x:2x2x1
jax: 0.10.0
libtpu: 0.0.40
codegen_flags: <defaults>
</compile_context>

<pallas_src>
import functools

import jax
import jax.numpy as jnp
from jax.experimental import pallas as pl
from jax.experimental.pallas import tpu as pltpu

EPS = 1e-5
LANE = 128                    # pad GEMM K / Cout to lane-dense multiples
MXU_DTYPE = jnp.bfloat16      # MXU operands + stored GEMM outputs; acc is f32


def _round_up(x, m):
    return (x + m - 1) // m * m


def _device_defaults():
    """Per-generation VMEM budget / M-tile candidates (review items)."""
    kind = ""
    try:
        kind = jax.devices()[0].device_kind.lower()
    except Exception:
        pass
    if ("v5e" in kind) or ("v5 lite" in kind) or ("v6" in kind):
        # 128 MiB physical VMEM parts: raise the scoped limit, allow tm=1024.
        return 100 * 1024 * 1024, (1024, 512, 256, 128, 64)
    if ("7" in kind) or ("v4" in kind) or ("v5p" in kind):
        # v7x: 64 MiB physical VMEM -> conservative 32 MiB scoped, tm <= 512.
        return 32 * 1024 * 1024, (512, 256, 128, 64)
    # Unknown part: do not force a limit, keep conservative tiles.
    return None, (512, 256, 128, 64)


VMEM_LIMIT, TM_CANDIDATES = _device_defaults()


def _compiler_params():
    if VMEM_LIMIT is None:
        return pltpu.CompilerParams(dimension_semantics=("parallel",))
    return pltpu.CompilerParams(dimension_semantics=("parallel",),
                                vmem_limit_bytes=VMEM_LIMIT)


def _choose_tm(M):
    """Adaptive M tile: minimize padding waste, prefer >= 2 grid steps (so the
    'parallel' axis can pipeline and split across v7x's two TensorCores), and
    prefer the largest tile on ties."""
    best_key, best_tm = None, None
    for tm in TM_CANDIDATES:
        m_pad = _round_up(M, tm)
        key = (m_pad // tm < 2, m_pad - M, -tm)
        if best_key is None or key < best_key:
            best_key, best_tm = key, tm
    return best_tm


# ----------------------------------------------------------------------------
# Pallas kernels
# ----------------------------------------------------------------------------
def gemm_stats_kernel(*refs, fold_prologue=False, with_shortcut=False,
                      valid_rows=None):
    """One M-tile of Y = P @ W (bf16 operands, f32 MXU accumulation) plus this
    tile's per-channel f32 sum / sum-of-squares (two-pass training-mode BN).

    fold_prologue: apply p <- relu(p * bn1_scale_k + bn1_shift_k) on the patch
        tile (BN1+ReLU folded into the consumer GEMM) and zero rows past
        `valid_rows` so M-padding cannot contaminate the BN statistics.
    with_shortcut: also compute the 1x1 projection-shortcut GEMM + its stats
        from the same grid step (shares the pipeline with conv2).
    """
    if fold_prologue and with_shortcut:
        (p_ref, s_ref, t_ref, w_ref, psc_ref, wsc_ref,
         y_ref, ysc_ref, sum_ref, sq_ref, ssum_ref, ssq_ref) = refs
    elif fold_prologue:
        p_ref, s_ref, t_ref, w_ref, y_ref, sum_ref, sq_ref = refs
    else:
        p_ref, w_ref, y_ref, sum_ref, sq_ref = refs

    if fold_prologue:
        # BN1 + ReLU prologue (f32 VPU work, hidden under the MXU).
        p = jnp.maximum(p_ref[...].astype(jnp.float32) * s_ref[...]
                        + t_ref[...], 0.0)
        # Mask M-padding rows: after the prologue they would be relu(shift1)
        # instead of 0 and would corrupt the BN2 / shortcut statistics.
        row = (jax.lax.broadcasted_iota(jnp.int32, p.shape, 0)
               + pl.program_id(0) * p.shape[0])
        p = jnp.where(row < valid_rows, p, 0.0).astype(MXU_DTYPE)
    else:
        p = p_ref[...]

    y = jnp.dot(p, w_ref[...], preferred_element_type=jnp.float32)
    y_ref[...] = y.astype(y_ref.dtype)                        # bf16 store
    sum_ref[...] = jnp.sum(y, axis=0, keepdims=True)[None]    # f32 stats
    sq_ref[...] = jnp.sum(y * y, axis=0, keepdims=True)[None]

    if with_shortcut:
        ysc = jnp.dot(psc_ref[...], wsc_ref[...],
                      preferred_element_type=jnp.float32)
        ysc_ref[...] = ysc.astype(ysc_ref.dtype)
        ssum_ref[...] = jnp.sum(ysc, axis=0, keepdims=True)[None]
        ssq_ref[...] = jnp.sum(ysc * ysc, axis=0, keepdims=True)[None]


def bn_add_relu_kernel(y_ref, sc_ref, a_ref, b_ref, asc_ref, bsc_ref, o_ref):
    """Fused block tail: BN2(conv2) + BN(shortcut)/identity + add + ReLU."""
    main = y_ref[...].astype(jnp.float32) * a_ref[...] + b_ref[...]
    sc = sc_ref[...].astype(jnp.float32) * asc_ref[...] + bsc_ref[...]
    o_ref[...] = jnp.maximum(main + sc, 0.0).astype(o_ref.dtype)


# ----------------------------------------------------------------------------
# Pallas wrappers
# ----------------------------------------------------------------------------
def conv_gemm_stats_pallas(p, w, *, tm):
    """conv1 GEMM pass: y = p @ w (bf16 MXU operands, f32 accumulation),
    y stored bf16, per-tile per-channel f32 sum / sum-of-squares emitted."""
    M_pad, K_pad = p.shape
    C_pad = w.shape[1]
    nt = M_pad // tm
    kern = functools.partial(gemm_stats_kernel, fold_prologue=False,
                             with_shortcut=False)
    bytes_accessed = ((p.size + w.size) * 2 + M_pad * C_pad * 2
                      + 2 * nt * C_pad * 4)
    return pl.pallas_call(
        kern,
        out_shape=(
            jax.ShapeDtypeStruct((M_pad, C_pad), MXU_DTYPE),
            jax.ShapeDtypeStruct((nt, 1, C_pad), jnp.float32),
            jax.ShapeDtypeStruct((nt, 1, C_pad), jnp.float32),
        ),
        grid_spec=pltpu.PrefetchScalarGridSpec(
            num_scalar_prefetch=0,
            grid=(nt,),
            in_specs=[
                pl.BlockSpec((tm, K_pad), lambda i: (i, 0)),
                # Grid-invariant weight (constant index_map -> fetched once).
                # TODO(synk): pipeline_mode=pl.Buffered(1) to single-buffer.
                pl.BlockSpec((K_pad, C_pad), lambda i: (0, 0)),
            ],
            out_specs=[
                pl.BlockSpec((tm, C_pad), lambda i: (i, 0)),
                pl.BlockSpec((1, 1, C_pad), lambda i: (i, 0, 0)),
                pl.BlockSpec((1, 1, C_pad), lambda i: (i, 0, 0)),
            ],
        ),
        compiler_params=_compiler_params(),
        cost_estimate=pl.CostEstimate(flops=2 * M_pad * K_pad * C_pad,
                                      transcendentals=0,
                                      bytes_accessed=bytes_accessed),
    )(p, w)


def conv2_shortcut_gemm_pallas(p2, s1k, t1k, w2, psc=None, wsc=None, *,
                               tm, valid_rows):
    """Fused second GEMM pass: conv2 (with the BN1+ReLU prologue folded onto
    its patch tile) and, if present, the 1x1 projection shortcut GEMM.  Emits
    bf16 GEMM outputs plus f32 per-tile BN partial statistics for both."""
    M_pad, K2_pad = p2.shape
    C_pad = w2.shape[1]
    nt = M_pad // tm
    with_sc = psc is not None

    in_specs = [
        pl.BlockSpec((tm, K2_pad), lambda i: (i, 0)),   # conv2 patch tile
        pl.BlockSpec((1, K2_pad), lambda i: (0, 0)),    # BN1 scale (K-tiled)
        pl.BlockSpec((1, K2_pad), lambda i: (0, 0)),    # BN1 shift (K-tiled)
        # Grid-invariant weight (constant index_map -> fetched once).
        pl.BlockSpec((K2_pad, C_pad), lambda i: (0, 0)),
    ]
    args = [p2, s1k.reshape(1, -1), t1k.reshape(1, -1), w2]
    out_shape = [jax.ShapeDtypeStruct((M_pad, C_pad), MXU_DTYPE)]       # y2
    out_specs = [pl.BlockSpec((tm, C_pad), lambda i: (i, 0))]
    flops = 2 * M_pad * K2_pad * C_pad
    bytes_accessed = ((p2.size + w2.size) * 2 + 2 * K2_pad * 4
                      + M_pad * C_pad * 2 + 2 * nt * C_pad * 4)

    if with_sc:
        Ksc_pad = psc.shape[1]
        in_specs += [
            pl.BlockSpec((tm, Ksc_pad), lambda i: (i, 0)),    # shortcut patch
            pl.BlockSpec((Ksc_pad, C_pad), lambda i: (0, 0)),  # shortcut weight
        ]
        args += [psc, wsc]
        out_shape += [jax.ShapeDtypeStruct((M_pad, C_pad), MXU_DTYPE)]  # y_sc
        out_specs += [pl.BlockSpec((tm, C_pad), lambda i: (i, 0))]
        flops += 2 * M_pad * Ksc_pad * C_pad
        bytes_accessed += ((psc.size + wsc.size) * 2 + M_pad * C_pad * 2
                           + 2 * nt * C_pad * 4)

    stat = jax.ShapeDtypeStruct((nt, 1, C_pad), jnp.float32)
    stat_spec = pl.BlockSpec((1, 1, C_pad), lambda i: (i, 0, 0))
    out_shape += [stat, stat]            # sum2, sumsq2
    out_specs += [stat_spec, stat_spec]
    if with_sc:
        out_shape += [stat, stat]        # sum_sc, sumsq_sc
        out_specs += [stat_spec, stat_spec]

    kern = functools.partial(gemm_stats_kernel, fold_prologue=True,
                             with_shortcut=with_sc, valid_rows=valid_rows)
    return pl.pallas_call(
        kern,
        out_shape=tuple(out_shape),
        grid_spec=pltpu.PrefetchScalarGridSpec(
            num_scalar_prefetch=0, grid=(nt,),
            in_specs=in_specs, out_specs=out_specs),
        compiler_params=_compiler_params(),
        cost_estimate=pl.CostEstimate(flops=flops, transcendentals=0,
                                      bytes_accessed=bytes_accessed),
    )(*args)


def bn_add_relu_pallas(y, sc, scale, shift, scale_sc, shift_sc, *, tm,
                       out_dtype=jnp.float32):
    """Tail pass over lane-dense tiles: out = relu(y*s2+t2 + sc*ssc+tsc)."""
    M_pad, C_pad = y.shape
    nt = M_pad // tm
    bytes_accessed = (y.size * y.dtype.itemsize + sc.size * sc.dtype.itemsize
                      + M_pad * C_pad * 4 + 4 * C_pad * 4)
    return pl.pallas_call(
        bn_add_relu_kernel,
        out_shape=jax.ShapeDtypeStruct((M_pad, C_pad), out_dtype),
        grid_spec=pltpu.PrefetchScalarGridSpec(
            num_scalar_prefetch=0,
            grid=(nt,),
            in_specs=[
                pl.BlockSpec((tm, C_pad), lambda i: (i, 0)),
                pl.BlockSpec((tm, C_pad), lambda i: (i, 0)),
                pl.BlockSpec((1, C_pad), lambda i: (0, 0)),
                pl.BlockSpec((1, C_pad), lambda i: (0, 0)),
                pl.BlockSpec((1, C_pad), lambda i: (0, 0)),
                pl.BlockSpec((1, C_pad), lambda i: (0, 0)),
            ],
            out_specs=pl.BlockSpec((tm, C_pad), lambda i: (i, 0)),
        ),
        compiler_params=_compiler_params(),
        cost_estimate=pl.CostEstimate(flops=6 * M_pad * C_pad,
                                      transcendentals=0,
                                      bytes_accessed=bytes_accessed),
    )(y, sc, scale.reshape(1, -1), shift.reshape(1, -1),
      scale_sc.reshape(1, -1), shift_sc.reshape(1, -1))


# ----------------------------------------------------------------------------
# Plain-JAX glue: im2col, padding, weight reshape, BN folding
# ----------------------------------------------------------------------------
def im2col_nhwc(x_nhwc, ksize, stride, pad, pad_value=None):
    """x [N,H,W,C] -> patches [N*Ho*Wo, ksize*ksize*C] (column order kh,kw,C).

    pad_value (optional per-channel [C]) replaces the zero spatial padding --
    used to carry the BN1-fold border sentinel for conv2's patch matrix."""
    N, H, W, C = x_nhwc.shape
    if pad > 0:
        if pad_value is None:
            xp = jnp.pad(x_nhwc, ((0, 0), (pad, pad), (pad, pad), (0, 0)))
        else:
            v = pad_value.reshape(1, 1, 1, C).astype(x_nhwc.dtype)
            xp = jnp.broadcast_to(v, (N, H + 2 * pad, W + 2 * pad, C))
            xp = xp.at[:, pad:pad + H, pad:pad + W, :].set(x_nhwc)
    else:
        xp = x_nhwc
    Ho = (H + 2 * pad - ksize) // stride + 1
    Wo = (W + 2 * pad - ksize) // stride + 1
    cols = []
    for kh in range(ksize):
        for kw in range(ksize):
            cols.append(xp[:, kh:kh + stride * Ho:stride,
                           kw:kw + stride * Wo:stride, :])
    p = jnp.stack(cols, axis=3)                         # [N, Ho, Wo, k*k, C]
    return p.reshape(N * Ho * Wo, ksize * ksize * C), (N, Ho, Wo)


def _pad2d(a, rows, cols):
    r, c = a.shape
    return jnp.pad(a, ((0, rows - r), (0, cols - c)))


def conv_weight_to_matrix(w_oihw, k_pad, c_pad):
    """PyTorch (O,I,kh,kw) -> zero-padded bf16 (k_pad, c_pad) GEMM matrix."""
    O, I, kh, kw = w_oihw.shape
    w = jnp.transpose(w_oihw, (2, 3, 1, 0)).reshape(kh * kw * I, O)
    return _pad2d(w, k_pad, c_pad).astype(MXU_DTYPE)


def prep_patches(x_nhwc, w_oihw, *, ksize, stride, pad, tm, pad_value=None):
    """im2col + lane/sublane padding -> bf16 GEMM operands + geometry.
    Zero padding is numerically inert for the GEMM and the BN statistics."""
    patches, (N, Ho, Wo) = im2col_nhwc(x_nhwc, ksize, stride, pad, pad_value)
    M, K = patches.shape
    Cout = w_oihw.shape[0]
    K_pad = _round_up(K, LANE)
    C_pad = _round_up(Cout, LANE)   # NOTE: heavy padding for Cout < 128 layers
    M_pad = _round_up(M, tm)
    p = _pad2d(patches, M_pad, K_pad).astype(MXU_DTYPE)
    w = conv_weight_to_matrix(w_oihw, K_pad, C_pad)
    meta = dict(M=M, M_pad=M_pad, K=K, K_pad=K_pad, Cout=Cout, C_pad=C_pad,
                shape=(N, Ho, Wo))
    return p, w, meta


def fold_bn(sum_parts, sq_parts, gamma_pad, beta_pad, m_rows):
    """Global batch stats from per-tile partials, folded into y*scale+shift.
    Training-mode BatchNorm: biased variance, eps=1e-5."""
    s = jnp.sum(sum_parts, axis=(0, 1))
    sq = jnp.sum(sq_parts, axis=(0, 1))
    mean = s / m_rows
    var = sq / m_rows - mean * mean
    scale = gamma_pad * jax.lax.rsqrt(var + EPS)
    shift = beta_pad - mean * scale
    return scale, shift


def _pad_channels(v, c_pad):
    return jnp.pad(v.astype(jnp.float32), (0, c_pad - v.shape[0]))


# ----------------------------------------------------------------------------
# BasicBlock forward
# ----------------------------------------------------------------------------
def basic_block_forward(x_nchw, params, *, stride):
    """Pallas implementation of BasicBlock.forward (NCHW in / NCHW out,
    PyTorch training-mode BatchNorm semantics)."""
    x_nhwc = jnp.transpose(x_nchw, (0, 2, 3, 1)).astype(jnp.float32)
    planes = params["w1"].shape[0]
    in_planes = params["w1"].shape[1]
    N, H, W, _ = x_nhwc.shape
    Ho = (H + 2 - 3) // stride + 1
    Wo = (W + 2 - 3) // stride + 1
    M = N * Ho * Wo
    tm = _choose_tm(M)

    # ---- conv1 (3x3, stride) + BN1 batch statistics: one GEMM pass ---------
    p1, w1m, m1 = prep_patches(x_nhwc, params["w1"], ksize=3, stride=stride,
                               pad=1, tm=tm)
    assert m1["M"] == M
    C_pad, M_pad = m1["C_pad"], m1["M_pad"]
    y1, sum1, sq1 = conv_gemm_stats_pallas(p1, w1m, tm=tm)
    scale1, shift1 = fold_bn(sum1, sq1, _pad_channels(params["g1"], C_pad),
                             _pad_channels(params["b1"], C_pad), M)

    # ---- BN1 + ReLU folded into the conv2 GEMM prologue (no extra pass) ----
    s1c, t1c = scale1[:planes], shift1[:planes]
    # Border sentinel: conv2's spatially padded patch entries must come out of
    # the prologue as relu(v*scale1 + shift1) == 0  =>  v = -shift1/scale1.
    # TODO(synk): a channel with gamma1 == 0 exactly has no such sentinel; the
    #             (pathological) error would be confined to border pixels.
    safe = jnp.where(s1c == 0.0, 1.0, s1c)
    border_v = jnp.where(s1c == 0.0, 0.0, -t1c / safe)

    y1_nhwc = y1[:M, :planes].astype(jnp.float32).reshape(N, Ho, Wo, planes)
    p2, w2m, m2 = prep_patches(y1_nhwc, params["w2"], ksize=3, stride=1,
                               pad=1, tm=tm, pad_value=border_v)
    assert m2["M"] == M and m2["M_pad"] == M_pad and m2["C_pad"] == C_pad
    K2, K2_pad = m2["K"], m2["K_pad"]
    s1k = jnp.pad(jnp.tile(s1c, 9), (0, K2_pad - K2))
    t1k = jnp.pad(jnp.tile(t1c, 9), (0, K2_pad - K2))

    # ---- conv2 GEMM (+BN1 prologue), fused with the 1x1 projection shortcut -
    if params.get("ws") is not None:
        psc, wscm, msc = prep_patches(x_nhwc, params["ws"], ksize=1,
                                      stride=stride, pad=0, tm=tm)
        assert msc["M"] == M and msc["C_pad"] == C_pad
        y2, ysc, sum2, sq2, sums, sqs = conv2_shortcut_gemm_pallas(
            p2, s1k, t1k, w2m, psc, wscm, tm=tm, valid_rows=M)
        scale_sc, shift_sc = fold_bn(
            sums, sqs, _pad_channels(params["gs"], C_pad),
            _pad_channels(params["bs"], C_pad), M)
        sc = ysc
    else:
        # Identity shortcut (stride == 1 and in_planes == planes): raw x.
        y2, sum2, sq2 = conv2_shortcut_gemm_pallas(
            p2, s1k, t1k, w2m, tm=tm, valid_rows=M)
        sc = _pad2d(x_nhwc.reshape(M, in_planes), M_pad, C_pad)
        scale_sc = _pad_channels(jnp.ones((planes,), jnp.float32), C_pad)
        shift_sc = jnp.zeros((C_pad,), jnp.float32)

    scale2, shift2 = fold_bn(sum2, sq2, _pad_channels(params["g2"], C_pad),
                             _pad_channels(params["b2"], C_pad), M)

    # ---- fused tail: BN2 + BN_shortcut/identity + residual add + ReLU ------
    out = bn_add_relu_pallas(y2, sc, scale2, shift2, scale_sc, shift_sc, tm=tm)
    out_nhwc = out[:M, :planes].reshape(N, Ho, Wo, planes)
    return jnp.transpose(out_nhwc, (0, 3, 1, 2))        # back to NCHW


# ----------------------------------------------------------------------------
# Pure-JAX f32 reference (PyTorch semantics, training-mode BN) for validation
# ----------------------------------------------------------------------------
def _conv_nchw(x, w, stride, pad):
    return jax.lax.conv_general_dilated(
        x, w, (stride, stride), [(pad, pad), (pad, pad)],
        dimension_numbers=("NCHW", "OIHW", "NCHW"))


def _bn_train(y, gamma, beta):
    mean = y.mean(axis=(0, 2, 3), keepdims=True)
    var = ((y - mean) ** 2).mean(axis=(0, 2, 3), keepdims=True)   # biased
    return ((y - mean) * jax.lax.rsqrt(var + EPS)
            * gamma.reshape(1, -1, 1, 1) + beta.reshape(1, -1, 1, 1))


def basic_block_reference(x, params, *, stride):
    out = jax.nn.relu(_bn_train(_conv_nchw(x, params["w1"], stride, 1),
                                params["g1"], params["b1"]))
    out = _bn_train(_conv_nchw(out, params["w2"], 1, 1),
                    params["g2"], params["b2"])
    if params.get("ws") is not None:
        sc = _bn_train(_conv_nchw(x, params["ws"], stride, 0),
                       params["gs"], params["bs"])
    else:
        sc = x
    return jax.nn.relu(out + sc)


# ----------------------------------------------------------------------------
if __name__ == "__main__":
    key = jax.random.PRNGKey(0)

    def make_params(k, in_planes, planes, with_shortcut):
        ks = jax.random.split(k, 9)
        p = {
            "w1": jax.random.normal(ks[0], (planes, in_planes, 3, 3),
                                    jnp.float32) * 0.1,
            "g1": 1.0 + 0.1 * jax.random.normal(ks[1], (planes,), jnp.float32),
            "b1": 0.1 * jax.random.normal(ks[2], (planes,), jnp.float32),
            "w2": jax.random.normal(ks[3], (planes, planes, 3, 3),
                                    jnp.float32) * 0.1,
            "g2": 1.0 + 0.1 * jax.random.normal(ks[4], (planes,), jnp.float32),
            "b2": 0.1 * jax.random.normal(ks[5], (planes,), jnp.float32),
        }
        if with_shortcut:
            p["ws"] = jax.random.normal(ks[6], (planes, in_planes, 1, 1),
                                        jnp.float32) * 0.1
            p["gs"] = 1.0 + 0.1 * jax.random.normal(ks[7], (planes,),
                                                    jnp.float32)
            p["bs"] = 0.1 * jax.random.normal(ks[8], (planes,), jnp.float32)
        return p

    k1, k2, kx1, kx2 = jax.random.split(key, 4)

    # Config 1: BasicBlock(in_planes=4, planes=8, stride=2) -> 1x1 projection.
    x1 = jax.random.normal(kx1, (2, 4, 16, 16), jnp.float32)
    params1 = make_params(k1, 4, 8, True)
    fwd1 = jax.jit(functools.partial(basic_block_forward, stride=2))
    out1 = jax.block_until_ready(fwd1(x1, params1))
    ref1 = basic_block_reference(x1, params1, stride=2)
    assert out1.shape == ref1.shape == (2, 8, 8, 8), out1.shape
    # Tolerance accounts for bf16 MXU operands and bf16-stored intermediates.
    assert jnp.allclose(out1, ref1, atol=5e-2, rtol=5e-2), (
        float(jnp.max(jnp.abs(out1 - ref1))))

    # Config 2: BasicBlock(in_planes=8, planes=8, stride=1) -> identity path.
    x2 = jax.random.normal(kx2, (2, 8, 8, 8), jnp.float32)
    params2 = make_params(k2, 8, 8, False)
    fwd2 = jax.jit(functools.partial(basic_block_forward, stride=1))
    out2 = jax.block_until_ready(fwd2(x2, params2))
    ref2 = basic_block_reference(x2, params2, stride=1)
    assert out2.shape == ref2.shape == (2, 8, 8, 8), out2.shape
    assert jnp.allclose(out2, ref2, atol=5e-2, rtol=5e-2), (
        float(jnp.max(jnp.abs(out2 - ref2))))

    print("KERNEL_OK")
</pallas_src>

<mosaic_0001>
module attributes {stable_mosaic.version = 11 : i64} {
  func.func @gemm_stats_kernel(%arg0: i32, %arg1: memref<64x128xbf16, #tpu.memory_space<vmem>>, %arg2: memref<128x128xbf16, #tpu.memory_space<vmem>>, %arg3: memref<64x128xbf16, #tpu.memory_space<vmem>>, %arg4: memref<1x1x128xf32, #tpu.memory_space<vmem>>, %arg5: memref<1x1x128xf32, #tpu.memory_space<vmem>>) attributes {dimension_semantics = [#tpu.dimension_semantics<parallel>], iteration_bounds = array<i64: 2>, scalar_prefetch = 0 : i64, scratch_operands = 0 : i64, tpu.core_type = #tpu.core_type<tc>, window_params = [{transform_indices = @transform_0, window_bounds = array<i64: 64, 128>}, {pipeline_mode = #tpu.pipeline_mode<synchronous>, transform_indices = @transform_1, window_bounds = array<i64: 128, 128>}, {transform_indices = @transform_2, window_bounds = array<i64: 64, 128>}, {transform_indices = @transform_3, window_bounds = array<i64: 1, 1, 128>}, {transform_indices = @transform_4, window_bounds = array<i64: 1, 1, 128>}]} {
    %c0 = arith.constant 0 : index
    %c0_0 = arith.constant 0 : index
    %0 = vector.load %arg1[%c0, %c0_0] : memref<64x128xbf16, #tpu.memory_space<vmem>>, vector<64x128xbf16>
    %c0_1 = arith.constant 0 : index
    %c0_2 = arith.constant 0 : index
    %1 = vector.load %arg2[%c0_1, %c0_2] : memref<128x128xbf16, #tpu.memory_space<vmem>>, vector<128x128xbf16>
    %cst = arith.constant dense<0.000000e+00> : vector<64x128xf32>
    %2 = tpu.matmul %0, %1, %cst {dimension_numbers = #tpu.dot_dimension_numbers<[1], [0], [0], [1], [0, 0, 1, 1], [], []>} : vector<64x128xbf16>, vector<128x128xbf16>, vector<64x128xf32> -> vector<64x128xf32>
    %3 = arith.truncf %2 : vector<64x128xf32> to vector<64x128xbf16>
    %c0_3 = arith.constant 0 : index
    %c0_4 = arith.constant 0 : index
    %4 = vector.load %arg3[%c0_3, %c0_4] : memref<64x128xbf16, #tpu.memory_space<vmem>>, vector<64x128xbf16>
    tpu.vector_store %arg3[%c0_3, %c0_4], %3 {strides = array<i32>} : memref<64x128xbf16, #tpu.memory_space<vmem>>, vector<64x128xbf16>,
    %cst_5 = arith.constant dense<0.000000e+00> : vector<128xf32>
    %5 = vector.multi_reduction <add>, %2, %cst_5 [0] : vector<64x128xf32> to vector<128xf32>
    %6 = vector.shape_cast %5 : vector<128xf32> to vector<1x128xf32>
    %7 = vector.shape_cast %6 : vector<1x128xf32> to vector<1x1x128xf32>
    %c0_6 = arith.constant 0 : index
    %c0_7 = arith.constant 0 : index
    %c0_8 = arith.constant 0 : index
    %8 = vector.load %arg4[%c0_6, %c0_7, %c0_8] : memref<1x1x128xf32, #tpu.memory_space<vmem>>, vector<1x1x128xf32>
    tpu.vector_store %arg4[%c0_6, %c0_7, %c0_8], %7 {strides = array<i32>} : memref<1x1x128xf32, #tpu.memory_space<vmem>>, vector<1x1x128xf32>,
    %9 = arith.mulf %2, %2 : vector<64x128xf32>
    %cst_9 = arith.constant dense<0.000000e+00> : vector<128xf32>
    %10 = vector.multi_reduction <add>, %9, %cst_9 [0] : vector<64x128xf32> to vector<128xf32>
    %11 = vector.shape_cast %10 : vector<128xf32> to vector<1x128xf32>
    %12 = vector.shape_cast %11 : vector<1x128xf32> to vector<1x1x128xf32>
    %c0_10 = arith.constant 0 : index
    %c0_11 = arith.constant 0 : index
    %c0_12 = arith.constant 0 : index
    %13 = vector.load %arg5[%c0_10, %c0_11, %c0_12] : memref<1x1x128xf32, #tpu.memory_space<vmem>>, vector<1x1x128xf32>
    tpu.vector_store %arg5[%c0_10, %c0_11, %c0_12], %12 {strides = array<i32>} : memref<1x1x128xf32, #tpu.memory_space<vmem>>, vector<1x1x128xf32>,
    return
  }
  func.func @transform_0(%arg0: i32) -> (i32, i32) {
    %c0_i32 = arith.constant 0 : i32
    %c0_i32_0 = arith.constant 0 : i32
    return %arg0, %c0_i32 : i32, i32
  }
  func.func @transform_1(%arg0: i32) -> (i32, i32) {
    %c0_i32 = arith.constant 0 : i32
    %c0_i32_0 = arith.constant 0 : i32
    %c0_i32_1 = arith.constant 0 : i32
    return %c0_i32, %c0_i32_0 : i32, i32
  }
  func.func @transform_2(%arg0: i32) -> (i32, i32) {
    %c0_i32 = arith.constant 0 : i32
    %c0_i32_0 = arith.constant 0 : i32
    return %arg0, %c0_i32 : i32, i32
  }
  func.func @transform_3(%arg0: i32) -> (i32, i32, i32) {
    %c0_i32 = arith.constant 0 : i32
    %c0_i32_0 = arith.constant 0 : i32
    %c0_i32_1 = arith.constant 0 : i32
    return %arg0, %c0_i32, %c0_i32_0 : i32, i32, i32
  }
  func.func @transform_4(%arg0: i32) -> (i32, i32, i32) {
    %c0_i32 = arith.constant 0 : i32
    %c0_i32_0 = arith.constant 0 : i32
    %c0_i32_1 = arith.constant 0 : i32
    return %arg0, %c0_i32, %c0_i32_0 : i32, i32, i32
  }
}

module attributes {stable_mosaic.version = 11 : i64} {
  func.func @bn_add_relu_kernel(%arg0: i32, %arg1: memref<64x128xbf16, #tpu.memory_space<vmem>>, %arg2: memref<64x128xbf16, #tpu.memory_space<vmem>>, %arg3: memref<1x128xf32, #tpu.memory_space<vmem>>, %arg4: memref<1x128xf32, #tpu.memory_space<vmem>>, %arg5: memref<1x128xf32, #tpu.memory_space<vmem>>, %arg6: memref<1x128xf32, #tpu.memory_space<vmem>>, %arg7: memref<64x128xf32, #tpu.memory_space<vmem>>) attributes {dimension_semantics = [#tpu.dimension_semantics<parallel>], iteration_bounds = array<i64: 2>, scalar_prefetch = 0 : i64, scratch_operands = 0 : i64, tpu.core_type = #tpu.core_type<tc>, window_params = [{transform_indices = @transform_0, window_bounds = array<i64: 64, 128>}, {transform_indices = @transform_1, window_bounds = array<i64: 64, 128>}, {pipeline_mode = #tpu.pipeline_mode<synchronous>, transform_indices = @transform_2, window_bounds = array<i64: 1, 128>}, {pipeline_mode = #tpu.pipeline_mode<synchronous>, transform_indices = @transform_3, window_bounds = array<i64: 1, 128>}, {pipeline_mode = #tpu.pipeline_mode<synchronous>, transform_indices = @transform_4, window_bounds = array<i64: 1, 128>}, {pipeline_mode = #tpu.pipeline_mode<synchronous>, transform_indices = @transform_5, window_bounds = array<i64: 1, 128>}, {transform_indices = @transform_6, window_bounds = array<i64: 64, 128>}]} {
    %c0 = arith.constant 0 : index
    %c0_0 = arith.constant 0 : index
    %0 = vector.load %arg1[%c0, %c0_0] : memref<64x128xbf16, #tpu.memory_space<vmem>>, vector<64x128xbf16>
    %1 = arith.extf %0 : vector<64x128xbf16> to vector<64x128xf32>
    %c0_1 = arith.constant 0 : index
    %c0_2 = arith.constant 0 : index
    %2 = vector.load %arg3[%c0_1, %c0_2] : memref<1x128xf32, #tpu.memory_space<vmem>>, vector<1x128xf32>
    %3 = vector.broadcast %2 : vector<1x128xf32> to vector<64x128xf32>
    %4 = arith.mulf %1, %3 : vector<64x128xf32>
    %c0_3 = arith.constant 0 : index
    %c0_4 = arith.constant 0 : index
    %5 = vector.load %arg4[%c0_3, %c0_4] : memref<1x128xf32, #tpu.memory_space<vmem>>, vector<1x128xf32>
    %6 = vector.broadcast %5 : vector<1x128xf32> to vector<64x128xf32>
    %7 = arith.addf %4, %6 : vector<64x128xf32>
    %c0_5 = arith.constant 0 : index
    %c0_6 = arith.constant 0 : index
    %8 = vector.load %arg2[%c0_5, %c0_6] : memref<64x128xbf16, #tpu.memory_space<vmem>>, vector<64x128xbf16>
    %9 = arith.extf %8 : vector<64x128xbf16> to vector<64x128xf32>
    %c0_7 = arith.constant 0 : index
    %c0_8 = arith.constant 0 : index
    %10 = vector.load %arg5[%c0_7, %c0_8] : memref<1x128xf32, #tpu.memory_space<vmem>>, vector<1x128xf32>
    %11 = vector.broadcast %10 : vector<1x128xf32> to vector<64x128xf32>
    %12 = arith.mulf %9, %11 : vector<64x128xf32>
    %c0_9 = arith.constant 0 : index
    %c0_10 = arith.constant 0 : index
    %13 = vector.load %arg6[%c0_9, %c0_10] : memref<1x128xf32, #tpu.memory_space<vmem>>, vector<1x128xf32>
    %14 = vector.broadcast %13 : vector<1x128xf32> to vector<64x128xf32>
    %15 = arith.addf %12, %14 : vector<64x128xf32>
    %16 = arith.addf %7, %15 : vector<64x128xf32>
    %cst = arith.constant 0.000000e+00 : f32
    %17 = vector.broadcast %cst : f32 to vector<64x128xf32>
    %18 = arith.maximumf %16, %17 : vector<64x128xf32>
    %c0_11 = arith.constant 0 : index
    %c0_12 = arith.constant 0 : index
    %19 = vector.load %arg7[%c0_11, %c0_12] : memref<64x128xf32, #tpu.memory_space<vmem>>, vector<64x128xf32>
    tpu.vector_store %arg7[%c0_11, %c0_12], %18 {strides = array<i32>} : memref<64x128xf32, #tpu.memory_space<vmem>>, vector<64x128xf32>,
    return
  }
  func.func @transform_0(%arg0: i32) -> (i32, i32) {
    %c0_i32 = arith.constant 0 : i32
    %c0_i32_0 = arith.constant 0 : i32
    return %arg0, %c0_i32 : i32, i32
  }
  func.func @transform_1(%arg0: i32) -> (i32, i32) {
    %c0_i32 = arith.constant 0 : i32
    %c0_i32_0 = arith.constant 0 : i32
    return %arg0, %c0_i32 : i32, i32
  }
  func.func @transform_2(%arg0: i32) -> (i32, i32) {
    %c0_i32 = arith.constant 0 : i32
    %c0_i32_0 = arith.constant 0 : i32
    %c0_i32_1 = arith.constant 0 : i32
    return %c0_i32, %c0_i32_0 : i32, i32
  }
  func.func @transform_3(%arg0: i32) -> (i32, i32) {
    %c0_i32 = arith.constant 0 : i32
    %c0_i32_0 = arith.constant 0 : i32
    %c0_i32_1 = arith.constant 0 : i32
    return %c0_i32, %c0_i32_0 : i32, i32
  }
  func.func @transform_4(%arg0: i32) -> (i32, i32) {
    %c0_i32 = arith.constant 0 : i32
    %c0_i32_0 = arith.constant 0 : i32
    %c0_i32_1 = arith.constant 0 : i32
    return %c0_i32, %c0_i32_0 : i32, i32
  }
  func.func @transform_5(%arg0: i32) -> (i32, i32) {
    %c0_i32 = arith.constant 0 : i32
    %c0_i32_0 = arith.constant 0 : i32
    %c0_i32_1 = arith.constant 0 : i32
    return %c0_i32, %c0_i32_0 : i32, i32
  }
  func.func @transform_6(%arg0: i32) -> (i32, i32) {
    %c0_i32 = arith.constant 0 : i32
    %c0_i32_0 = arith.constant 0 : i32
    return %arg0, %c0_i32 : i32, i32
  }
}

module attributes {stable_mosaic.version = 11 : i64} {
  func.func @gemm_stats_kernel(%arg0: i32, %arg1: memref<64x128xbf16, #tpu.memory_space<vmem>>, %arg2: memref<1x128xf32, #tpu.memory_space<vmem>>, %arg3: memref<1x128xf32, #tpu.memory_space<vmem>>, %arg4: memref<128x128xbf16, #tpu.memory_space<vmem>>, %arg5: memref<64x128xbf16, #tpu.memory_space<vmem>>, %arg6: memref<128x128xbf16, #tpu.memory_space<vmem>>, %arg7: memref<64x128xbf16, #tpu.memory_space<vmem>>, %arg8: memref<64x128xbf16, #tpu.memory_space<vmem>>, %arg9: memref<1x1x128xf32, #tpu.memory_space<vmem>>, %arg10: memref<1x1x128xf32, #tpu.memory_space<vmem>>, %arg11: memref<1x1x128xf32, #tpu.memory_space<vmem>>, %arg12: memref<1x1x128xf32, #tpu.memory_space<vmem>>) attributes {dimension_semantics = [#tpu.dimension_semantics<parallel>], iteration_bounds = array<i64: 2>, scalar_prefetch = 0 : i64, scratch_operands = 0 : i64, tpu.core_type = #tpu.core_type<tc>, window_params = [{transform_indices = @transform_0, window_bounds = array<i64: 64, 128>}, {pipeline_mode = #tpu.pipeline_mode<synchronous>, transform_indices = @transform_1, window_bounds = array<i64: 1, 128>}, {pipeline_mode = #tpu.pipeline_mode<synchronous>, transform_indices = @transform_2, window_bounds = array<i64: 1, 128>}, {pipeline_mode = #tpu.pipeline_mode<synchronous>, transform_indices = @transform_3, window_bounds = array<i64: 128, 128>}, {transform_indices = @transform_4, window_bounds = array<i64: 64, 128>}, {pipeline_mode = #tpu.pipeline_mode<synchronous>, transform_indices = @transform_5, window_bounds = array<i64: 128, 128>}, {transform_indices = @transform_6, window_bounds = array<i64: 64, 128>}, {transform_indices = @transform_7, window_bounds = array<i64: 64, 128>}, {transform_indices = @transform_8, window_bounds = array<i64: 1, 1, 128>}, {transform_indices = @transform_9, window_bounds = array<i64: 1, 1, 128>}, {transform_indices = @transform_10, window_bounds = array<i64: 1, 1, 128>}, {transform_indices = @transform_11, window_bounds = array<i64: 1, 1, 128>}]} {
    %c0 = arith.constant 0 : index
    %c0_0 = arith.constant 0 : index
    %0 = vector.load %arg1[%c0, %c0_0] : memref<64x128xbf16, #tpu.memory_space<vmem>>, vector<64x128xbf16>
    %1 = arith.extf %0 : vector<64x128xbf16> to vector<64x128xf32>
    %c0_1 = arith.constant 0 : index
    %c0_2 = arith.constant 0 : index
    %2 = vector.load %arg2[%c0_1, %c0_2] : memref<1x128xf32, #tpu.memory_space<vmem>>, vector<1x128xf32>
    %3 = vector.broadcast %2 : vector<1x128xf32> to vector<64x128xf32>
    %4 = arith.mulf %1, %3 : vector<64x128xf32>
    %c0_3 = arith.constant 0 : index
    %c0_4 = arith.constant 0 : index
    %5 = vector.load %arg3[%c0_3, %c0_4] : memref<1x128xf32, #tpu.memory_space<vmem>>, vector<1x128xf32>
    %6 = vector.broadcast %5 : vector<1x128xf32> to vector<64x128xf32>
    %7 = arith.addf %4, %6 : vector<64x128xf32>
    %cst = arith.constant 0.000000e+00 : f32
    %8 = vector.broadcast %cst : f32 to vector<64x128xf32>
    %9 = arith.maximumf %7, %8 : vector<64x128xf32>
    %10 = tpu.iota {dimensions = array<i32: 0>} : vector<64x128xi32>
    %c64_i32 = arith.constant 64 : i32
    %11 = arith.muli %arg0, %c64_i32 : i32
    %12 = vector.broadcast %11 : i32 to vector<64x128xi32>
    %13 = arith.addi %10, %12 : vector<64x128xi32>
    %c128_i32 = arith.constant 128 : i32
    %14 = vector.broadcast %c128_i32 : i32 to vector<64x128xi32>
    %15 = arith.cmpi slt, %13, %14 : vector<64x128xi32>
    %cst_5 = arith.constant 0.000000e+00 : f32
    %16 = vector.broadcast %cst_5 : f32 to vector<64x128xf32>
    %17 = arith.select %15, %9, %16 : vector<64x128xi1>, vector<64x128xf32>
    %18 = arith.truncf %17 : vector<64x128xf32> to vector<64x128xbf16>
    %c0_6 = arith.constant 0 : index
    %c0_7 = arith.constant 0 : index
    %19 = vector.load %arg4[%c0_6, %c0_7] : memref<128x128xbf16, #tpu.memory_space<vmem>>, vector<128x128xbf16>
    %cst_8 = arith.constant dense<0.000000e+00> : vector<64x128xf32>
    %20 = tpu.matmul %18, %19, %cst_8 {dimension_numbers = #tpu.dot_dimension_numbers<[1], [0], [0], [1], [0, 0, 1, 1], [], []>} : vector<64x128xbf16>, vector<128x128xbf16>, vector<64x128xf32> -> vector<64x128xf32>
    %21 = arith.truncf %20 : vector<64x128xf32> to vector<64x128xbf16>
    %c0_9 = arith.constant 0 : index
    %c0_10 = arith.constant 0 : index
    %22 = vector.load %arg7[%c0_9, %c0_10] : memref<64x128xbf16, #tpu.memory_space<vmem>>, vector<64x128xbf16>
    tpu.vector_store %arg7[%c0_9, %c0_10], %21 {strides = array<i32>} : memref<64x128xbf16, #tpu.memory_space<vmem>>, vector<64x128xbf16>,
    %cst_11 = arith.constant dense<0.000000e+00> : vector<128xf32>
    %23 = vector.multi_reduction <add>, %20, %cst_11 [0] : vector<64x128xf32> to vector<128xf32>
    %24 = vector.shape_cast %23 : vector<128xf32> to vector<1x128xf32>
    %25 = vector.shape_cast %24 : vector<1x128xf32> to vector<1x1x128xf32>
    %c0_12 = arith.constant 0 : index
    %c0_13 = arith.constant 0 : index
    %c0_14 = arith.constant 0 : index
    %26 = vector.load %arg9[%c0_12, %c0_13, %c0_14] : memref<1x1x128xf32, #tpu.memory_space<vmem>>, vector<1x1x128xf32>
    tpu.vector_store %arg9[%c0_12, %c0_13, %c0_14], %25 {strides = array<i32>} : memref<1x1x128xf32, #tpu.memory_space<vmem>>, vector<1x1x128xf32>,
    %27 = arith.mulf %20, %20 : vector<64x128xf32>
    %cst_15 = arith.constant dense<0.000000e+00> : vector<128xf32>
    %28 = vector.multi_reduction <add>, %27, %cst_15 [0] : vector<64x128xf32> to vector<128xf32>
    %29 = vector.shape_cast %28 : vector<128xf32> to vector<1x128xf32>
    %30 = vector.shape_cast %29 : vector<1x128xf32> to vector<1x1x128xf32>
    %c0_16 = arith.constant 0 : index
    %c0_17 = arith.constant 0 : index
    %c0_18 = arith.constant 0 : index
    %31 = vector.load %arg10[%c0_16, %c0_17, %c0_18] : memref<1x1x128xf32, #tpu.memory_space<vmem>>, vector<1x1x128xf32>
    tpu.vector_store %arg10[%c0_16, %c0_17, %c0_18], %30 {strides = array<i32>} : memref<1x1x128xf32, #tpu.memory_space<vmem>>, vector<1x1x128xf32>,
    %c0_19 = arith.constant 0 : index
    %c0_20 = arith.constant 0 : index
    %32 = vector.load %arg5[%c0_19, %c0_20] : memref<64x128xbf16, #tpu.memory_space<vmem>>, vector<64x128xbf16>
    %c0_21 = arith.constant 0 : index
    %c0_22 = arith.constant 0 : index
    %33 = vector.load %arg6[%c0_21, %c0_22] : memref<128x128xbf16, #tpu.memory_space<vmem>>, vector<128x128xbf16>
    %cst_23 = arith.constant dense<0.000000e+00> : vector<64x128xf32>
    %34 = tpu.matmul %32, %33, %cst_23 {dimension_numbers = #tpu.dot_dimension_numbers<[1], [0], [0], [1], [0, 0, 1, 1], [], []>} : vector<64x128xbf16>, vector<128x128xbf16>, vector<64x128xf32> -> vector<64x128xf32>
    %35 = arith.truncf %34 : vector<64x128xf32> to vector<64x128xbf16>
    %c0_24 = arith.constant 0 : index
    %c0_25 = arith.constant 0 : index
    %36 = vector.load %arg8[%c0_24, %c0_25] : memref<64x128xbf16, #tpu.memory_space<vmem>>, vector<64x128xbf16>
    tpu.vector_store %arg8[%c0_24, %c0_25], %35 {strides = array<i32>} : memref<64x128xbf16, #tpu.memory_space<vmem>>, vector<64x128xbf16>,
    %cst_26 = arith.constant dense<0.000000e+00> : vector<128xf32>
    %37 = vector.multi_reduction <add>, %34, %cst_26 [0] : vector<64x128xf32> to vector<128xf32>
    %38 = vector.shape_cast %37 : vector<128xf32> to vector<1x128xf32>
    %39 = vector.shape_cast %38 : vector<1x128xf32> to vector<1x1x128xf32>
    %c0_27 = arith.constant 0 : index
    %c0_28 = arith.constant 0 : index
    %c0_29 = arith.constant 0 : index
    %40 = vector.load %arg11[%c0_27, %c0_28, %c0_29] : memref<1x1x128xf32, #tpu.memory_space<vmem>>, vector<1x1x128xf32>
    tpu.vector_store %arg11[%c0_27, %c0_28, %c0_29], %39 {strides = array<i32>} : memref<1x1x128xf32, #tpu.memory_space<vmem>>, vector<1x1x128xf32>,
    %41 = arith.mulf %34, %34 : vector<64x128xf32>
    %cst_30 = arith.constant dense<0.000000e+00> : vector<128xf32>
    %42 = vector.multi_reduction <add>, %41, %cst_30 [0] : vector<64x128xf32> to vector<128xf32>
    %43 = vector.shape_cast %42 : vector<128xf32> to vector<1x128xf32>
    %44 = vector.shape_cast %43 : vector<1x128xf32> to vector<1x1x128xf32>
    %c0_31 = arith.constant 0 : index
    %c0_32 = arith.constant 0 : index
    %c0_33 = arith.constant 0 : index
    %45 = vector.load %arg12[%c0_31, %c0_32, %c0_33] : memref<1x1x128xf32, #tpu.memory_space<vmem>>, vector<1x1x128xf32>
    tpu.vector_store %arg12[%c0_31, %c0_32, %c0_33], %44 {strides = array<i32>} : memref<1x1x128xf32, #tpu.memory_space<vmem>>, vector<1x1x128xf32>,
    return
  }
  func.func @transform_0(%arg0: i32) -> (i32, i32) {
    %c0_i32 = arith.constant 0 : i32
    %c0_i32_0 = arith.constant 0 : i32
    return %arg0, %c0_i32 : i32, i32
  }
  func.func @transform_1(%arg0: i32) -> (i32, i32) {
    %c0_i32 = arith.constant 0 : i32
    %c0_i32_0 = arith.constant 0 : i32
    %c0_i32_1 = arith.constant 0 : i32
    return %c0_i32, %c0_i32_0 : i32, i32
  }
  func.func @transform_2(%arg0: i32) -> (i32, i32) {
    %c0_i32 = arith.constant 0 : i32
    %c0_i32_0 = arith.constant 0 : i32
    %c0_i32_1 = arith.constant 0 : i32
    return %c0_i32, %c0_i32_0 : i32, i32
  }
  func.func @transform_3(%arg0: i32) -> (i32, i32) {
    %c0_i32 = arith.constant 0 : i32
    %c0_i32_0 = arith.constant 0 : i32
    %c0_i32_1 = arith.constant 0 : i32
    return %c0_i32, %c0_i32_0 : i32, i32
  }
  func.func @transform_4(%arg0: i32) -> (i32, i32) {
    %c0_i32 = arith.constant 0 : i32
    %c0_i32_0 = arith.constant 0 : i32
    return %arg0, %c0_i32 : i32, i32
  }
  func.func @transform_5(%arg0: i32) -> (i32, i32) {
    %c0_i32 = arith.constant 0 : i32
    %c0_i32_0 = arith.constant 0 : i32
    %c0_i32_1 = arith.constant 0 : i32
    return %c0_i32, %c0_i32_0 : i32, i32
  }
  func.func @transform_6(%arg0: i32) -> (i32, i32) {
    %c0_i32 = arith.constant 0 : i32
    %c0_i32_0 = arith.constant 0 : i32
    return %arg0, %c0_i32 : i32, i32
  }
  func.func @transform_7(%arg0: i32) -> (i32, i32) {
    %c0_i32 = arith.constant 0 : i32
    %c0_i32_0 = arith.constant 0 : i32
    return %arg0, %c0_i32 : i32, i32
  }
  func.func @transform_8(%arg0: i32) -> (i32, i32, i32) {
    %c0_i32 = arith.constant 0 : i32
    %c0_i32_0 = arith.constant 0 : i32
    %c0_i32_1 = arith.constant 0 : i32
    return %arg0, %c0_i32, %c0_i32_0 : i32, i32, i32
  }
  func.func @transform_9(%arg0: i32) -> (i32, i32, i32) {
    %c0_i32 = arith.constant 0 : i32
    %c0_i32_0 = arith.constant 0 : i32
    %c0_i32_1 = arith.constant 0 : i32
    return %arg0, %c0_i32, %c0_i32_0 : i32, i32, i32
  }
  func.func @transform_10(%arg0: i32) -> (i32, i32, i32) {
    %c0_i32 = arith.constant 0 : i32
    %c0_i32_0 = arith.constant 0 : i32
    %c0_i32_1 = arith.constant 0 : i32
    return %arg0, %c0_i32, %c0_i32_0 : i32, i32, i32
  }
  func.func @transform_11(%arg0: i32) -> (i32, i32, i32) {
    %c0_i32 = arith.constant 0 : i32
    %c0_i32_0 = arith.constant 0 : i32
    %c0_i32_1 = arith.constant 0 : i32
    return %arg0, %c0_i32, %c0_i32_0 : i32, i32, i32
  }
}

</mosaic_0001>

<llo_original>
// kernel: basic_block_forward.3
$region0: #{basic_block_forward.3}
  #allocation0 [shape = 'u32[]', space=smem, size = 0x4, offset = 0x4, fixed_abs, tag = 'smem constant byte address 0x4 - core index']
  #allocation1 [shape = 'u32[144,128]{1,0:T(1,128)}', space=vmem, size = 0x12000, scoped, tag = 'internal scratch']
  %s0 = inlined_call_operand.vmem [shape: bf16[128,128], index: 0, kind: input, shape index: {}]
  %s1 = inlined_call_operand.vmem [shape: bf16[128,128], index: 1, kind: input, shape index: {}]
  %s2 = inlined_call_operand.vmem [shape: bf16[128,128], index: 2, kind: output, shape index: {0}]
  %s3 = inlined_call_operand.vmem [shape: f32[2,1,128], index: 3, kind: output, shape index: {1}]
  %s4 = inlined_call_operand.vmem [shape: f32[2,1,128], index: 4, kind: output, shape index: {2}]
  %5 = xla_tuple %s2, %s3, %s4
  %s6 = sld [smem:[#allocation0]]
  $region57: #{basic_block_forward.3} parent=0
    _
  %s8 = ssub.s32 1, %s6
  %s9 = scalar_select 0, %s8, %s6
  loop: start=0, step=1, limit=4
  $region2: #{basic_block_forward.3} parent=0 // loop_pre_header
    _
  $region3: #{basic_block_forward.3} parent=0 // loop_header
    %s11 = sphi 0, %s15
    %p12 = scmp.ge.s32.totalorder %s11, 4
    %s21 = sphi 0, %s23
    %s24 = sphi 0, %s21
    %s25 = sphi 0, %s24
    %s41 = sphi 0, %s25
    %s45 = sphi 0, %s45
    %s47 = sphi 0, %s45
    %s48 = sphi 0, %s47
    %s62 = sphi 0, %s48
    %s68 = sphi 0, %s70
    %s71 = sphi 0, %s68
    %s72 = sphi 0, %s71
    %s88 = sphi 0, %s72
    %s94 = sphi 0, %s96
    %s97 = sphi 0, %s94
    %s98 = sphi 0, %s97
    %s114 = sphi 0, %s98
    %s120 = sphi 0, %s122
    %s123 = sphi 0, %s120
    %s124 = sphi 0, %s123
    %s140 = sphi 0, %s124
  $region4: #{basic_block_forward.3} parent=0 // loop_header_branch
    %14 = sbr.rel (%p12) target = $region8
  $region5: #{basic_block_forward.3} parent=0 // loop_body
    %s16 = ssub.s32 %s11, 1
    %s17 = ssub.s32 %s11, 2
    %s18 = sadd.s32 %s11, 1
    %s19 = ssub.s32 %s11, %s18
    %p20 = scmp.eq.s32.totalorder %s19, 0
    %s22 = sadd.s32 %s21, 1
    %s23 = scalar_select %p20, %s21, %s22
    %p26 = pneg %p20
    %p27 = scmp.eq.s32.totalorder %s11, 1
    %p28 = por %p26, %p27
    %p29 = scmp.ne.s32.totalorder %s21, %s24
    %p30 = scmp.eq.s32.totalorder %s11, 0
    %p31 = por %p29, %p30
    %p32 = scmp.ne.s32.totalorder %s21, %s24
    %p33 = scmp.eq.s32.totalorder %s16, 1
    %p34 = por %p32, %p33
    %p35 = scmp.ne.s32.totalorder %s24, %s25
    %p36 = scmp.eq.s32.totalorder %s16, 0
    %p37 = por %p35, %p36
    %p38 = scmp.ne.s32.totalorder %s24, %s25
    %p39 = scmp.eq.s32.totalorder %s17, 1
    %p40 = por %p38, %p39
    %p42 = scmp.ne.s32.totalorder %s25, %s41
    %p43 = scmp.eq.s32.totalorder %s17, 0
    %p44 = por %p42, %p43
    %s46 = sadd.s32 %s45, 1
    %p49 = scmp.eq.s32.totalorder %s11, 1
    %p50 = scmp.ne.s32.totalorder %s45, %s47
    %p51 = scmp.eq.s32.totalorder %s11, 0
    %p52 = por %p50, %p51
    %p53 = scmp.ne.s32.totalorder %s45, %s47
    %p54 = scmp.eq.s32.totalorder %s16, 1
    %p55 = por %p53, %p54
    %p56 = scmp.ne.s32.totalorder %s47, %s48
    %p57 = scmp.eq.s32.totalorder %s16, 0
    %p58 = por %p56, %p57
    %p59 = scmp.ne.s32.totalorder %s47, %s48
    %p60 = scmp.eq.s32.totalorder %s17, 1
    %p61 = por %p59, %p60
    %p63 = scmp.ne.s32.totalorder %s48, %s62
    %p64 = scmp.eq.s32.totalorder %s17, 0
    %p65 = por %p63, %p64
    %s66 = ssub.s32 %s11, %s18
    %p67 = scmp.eq.s32.totalorder %s66, 0
    %s69 = sadd.s32 %s68, 1
    %s70 = scalar_select %p67, %s68, %s69
    %p73 = pneg %p67
    %p74 = scmp.eq.s32.totalorder %s11, 1
    %p75 = por %p73, %p74
    %p76 = scmp.ne.s32.totalorder %s68, %s71
    %p77 = scmp.eq.s32.totalorder %s11, 0
    %p78 = por %p76, %p77
    %p79 = scmp.ne.s32.totalorder %s68, %s71
    %p80 = scmp.eq.s32.totalorder %s16, 1
    %p81 = por %p79, %p80
    %p82 = scmp.ne.s32.totalorder %s71, %s72
    %p83 = scmp.eq.s32.totalorder %s16, 0
    %p84 = por %p82, %p83
    %p85 = scmp.ne.s32.totalorder %s71, %s72
    %p86 = scmp.eq.s32.totalorder %s17, 1
    %p87 = por %p85, %p86
    %p89 = scmp.ne.s32.totalorder %s72, %s88
    %p90 = scmp.eq.s32.totalorder %s17, 0
    %p91 = por %p89, %p90
    %s92 = ssub.s32 %s11, %s18
    %p93 = scmp.eq.s32.totalorder %s92, 0
    %s95 = sadd.s32 %s94, 1
    %s96 = scalar_select %p93, %s94, %s95
    %p99 = pneg %p93
    %p100 = scmp.eq.s32.totalorder %s11, 1
    %p101 = por %p99, %p100
    %p102 = scmp.ne.s32.totalorder %s94, %s97
    %p103 = scmp.eq.s32.totalorder %s11, 0
    %p104 = por %p102, %p103
    %p105 = scmp.ne.s32.totalorder %s94, %s97
    %p106 = scmp.eq.s32.totalorder %s16, 1
    %p107 = por %p105, %p106
    %p108 = scmp.ne.s32.totalorder %s97, %s98
    %p109 = scmp.eq.s32.totalorder %s16, 0
    %p110 = por %p108, %p109
    %p111 = scmp.ne.s32.totalorder %s97, %s98
    %p112 = scmp.eq.s32.totalorder %s17, 1
    %p113 = por %p111, %p112
    %p115 = scmp.ne.s32.totalorder %s98, %s114
    %p116 = scmp.eq.s32.totalorder %s17, 0
    %p117 = por %p115, %p116
    %s118 = ssub.s32 %s11, %s18
    %p119 = scmp.eq.s32.totalorder %s118, 0
    %s121 = sadd.s32 %s120, 1
    %s122 = scalar_select %p119, %s120, %s121
    %p125 = pneg %p119
    %p126 = scmp.eq.s32.totalorder %s11, 1
    %p127 = por %p125, %p126
    %p128 = scmp.ne.s32.totalorder %s120, %s123
    %p129 = scmp.eq.s32.totalorder %s11, 0
    %p130 = por %p128, %p129
    %p131 = scmp.ne.s32.totalorder %s120, %s123
    %p132 = scmp.eq.s32.totalorder %s16, 1
    %p133 = por %p131, %p132
    %p134 = scmp.ne.s32.totalorder %s123, %s124
    %p135 = scmp.eq.s32.totalorder %s16, 0
    %p136 = por %p134, %p135
    %p137 = scmp.ne.s32.totalorder %s123, %s124
    %p138 = scmp.eq.s32.totalorder %s17, 1
    %p139 = por %p137, %p138
    %p141 = scmp.ne.s32.totalorder %s124, %s140
    %p142 = scmp.eq.s32.totalorder %s17, 0
    %p143 = por %p141, %p142
    %p144 = scmp.le.s32.totalorder 1, %s11
    %p145 = scmp.lt.s32.totalorder %s11, 3
    %p146 = pnand %p144, %p145
    %p147 = pneg %p146
    // Predicated region
    $region9: #{basic_block_forward.3} parent=5 // pred_check
      _
    $region10: #{basic_block_forward.3} parent=5 // pred_check_branch
      %149 = sbr.rel (%p146) target = $region12
    $region11: #{basic_block_forward.3} parent=5 // pred_region
      %s150 = ssub.s32 %s11, 1
      // Predicated region
      $region13: #{basic_block_forward.3} parent=11 // pred_check
        %p151 = pneg %p58
      $region14: #{basic_block_forward.3} parent=11 // pred_check_branch
        %153 = sbr.rel (%p151) target = $region16
      $region15: #{basic_block_forward.3} parent=11 // pred_region
        _
      $region16: #{basic_block_forward.3} parent=11 // pred_fallthru
        _
    $region12: #{basic_block_forward.3} parent=5 // pred_fallthru
      _
    %p154 = scmp.lt.s32.totalorder %s11, 2
    // Predicated region
    $region17: #{basic_block_forward.3} parent=5 // pred_check
      %p155 = pneg %p154
    $region18: #{basic_block_forward.3} parent=5 // pred_check_branch
      %157 = sbr.rel (%p155) target = $region20
    $region19: #{basic_block_forward.3} parent=5 // pred_region
      // Predicated region
      $region21: #{basic_block_forward.3} parent=19 // pred_check
        %p158 = pneg %p31
      $region22: #{basic_block_forward.3} parent=19 // pred_check_branch
        %160 = sbr.rel (%p158) target = $region24
      $region23: #{basic_block_forward.3} parent=19 // pred_region
        %s161 = smul.u32 8, %s11
        %p162 = scmp.lt.s32.totalorder %s161, 15
        %s163 = scalar_select %p162, %s161, 15
        %s164 = smul.addr %s163, 4
        %s165 = scalar_lea.vmem %s0, %s164
        %s166 = smul.u32 8, %s11
      $region24: #{basic_block_forward.3} parent=19 // pred_fallthru
        _
    $region20: #{basic_block_forward.3} parent=5 // pred_fallthru
      _
    %p167 = scmp.le.s32.totalorder 1, %s11
    %p168 = scmp.lt.s32.totalorder %s11, 3
    %p169 = pnand %p167, %p168
    %p170 = pneg %p169
    // Predicated region
    $region25: #{basic_block_forward.3} parent=5 // pred_check
      _
    $region26: #{basic_block_forward.3} parent=5 // pred_check_branch
      %172 = sbr.rel (%p169) target = $region28
    $region27: #{basic_block_forward.3} parent=5 // pred_region
      %s173 = ssub.s32 %s11, 1
      %s174 = smul.u32 8, %s16
      %p175 = scmp.lt.s32.totalorder %s174, 15
      %s176 = scalar_select %p175, %s174, 15
      %s177 = smul.addr %s176, 4
      %s178 = scalar_lea.vmem %s0, %s177
      %p179 = pneg %p37
      %p180 = pneg %p34
      %p181 = pneg %p58
      %p182 = pneg %p55
      %p183 = pneg %p84
      %p184 = pneg %p81
      %s185 = smul.u32 8, %s16
      %p186 = scmp.lt.s32.totalorder %s185, 15
      %s187 = scalar_select %p186, %s185, 15
      %s188 = smul.addr %s187, 4
      %s189 = scalar_lea.vmem %s2, %s188
      %p190 = pneg %p110
      %p191 = pneg %p107
      %p192 = scmp.lt.s32.totalorder %s16, 1
      %s193 = scalar_select %p192, %s16, 1
      %s194 = scalar_lea.vmem %s3, %s193
      %p195 = pneg %p136
      %p196 = pneg %p133
      %p197 = scmp.lt.s32.totalorder %s16, 1
      %s198 = scalar_select %p197, %s16, 1
      %s199 = scalar_lea.vmem %s4, %s198
      %s200 = smul.u32 8, %s16
      %p201 = scmp.lt.s32.totalorder %s200, 15
      %s202 = scalar_select %p201, %s200, 15
      %s203 = smul.addr %s202, 4
      %s204 = scalar_lea.vmem %s0, %s203
      %s205 = smul.u32 8, %s16
      %s206 = smul.u32 8, %s16
      %p207 = scmp.lt.s32.totalorder %s206, 15
      %s208 = scalar_select %p207, %s206, 15
      %s209 = smul.addr %s208, 4
      %s210 = scalar_lea.vmem %s2, %s209
      %s211 = smul.u32 8, %s16
      %p212 = scmp.lt.s32.totalorder %s16, 1
      %s213 = scalar_select %p212, %s16, 1
      %s214 = scalar_lea.vmem %s3, %s213
      %p215 = scmp.lt.s32.totalorder %s16, 1
      %s216 = scalar_select %p215, %s16, 1
      %s217 = scalar_lea.vmem %s4, %s216
      %v219 = vld [vmem:[%s204] sm:$0xf]
      %v220 = vld [vmem:[%s204 + $0x4] sm:$0xf]
      %v221 = vld [vmem:[%s204 + $0x8] sm:$0xf]
      %v222 = vld [vmem:[%s204 + $0xc] sm:$0xf]
      %v223 = vld [vmem:[%s204 + $0x10] sm:$0xf]
      %v224 = vld [vmem:[%s204 + $0x14] sm:$0xf]
      %v225 = vld [vmem:[%s204 + $0x18] sm:$0xf]
      %v226 = vld [vmem:[%s204 + $0x1c] sm:$0xf]
      %v227 = vld [vmem:[%s1] sm:$0xf]
      %v228 = vld [vmem:[%s1 + $0x4] sm:$0xf]
      %v229 = vld [vmem:[%s1 + $0x8] sm:$0xf]
      %v230 = vld [vmem:[%s1 + $0xc] sm:$0xf]
      %v231 = vld [vmem:[%s1 + $0x10] sm:$0xf]
      %v232 = vld [vmem:[%s1 + $0x14] sm:$0xf]
      %v233 = vld [vmem:[%s1 + $0x18] sm:$0xf]
      %v234 = vld [vmem:[%s1 + $0x1c] sm:$0xf]
      %v235 = vld [vmem:[%s1 + $0x20] sm:$0xf]
      %v236 = vld [vmem:[%s1 + $0x24] sm:$0xf]
      %v237 = vld [vmem:[%s1 + $0x28] sm:$0xf]
      %v238 = vld [vmem:[%s1 + $0x2c] sm:$0xf]
      %v239 = vld [vmem:[%s1 + $0x30] sm:$0xf]
      %v240 = vld [vmem:[%s1 + $0x34] sm:$0xf]
      %v241 = vld [vmem:[%s1 + $0x38] sm:$0xf]
      %v242 = vld [vmem:[%s1 + $0x3c] sm:$0xf]
      %v251 = vunpack.c.l.b16 %v219
      %v252 = vunpack.c.l.b16 %v220
      %v253 = vunpack.c.l.b16 %v221
      %v254 = vunpack.c.l.b16 %v222
      %v255 = vunpack.c.l.b16 %v223
      %v256 = vunpack.c.l.b16 %v224
      %v257 = vunpack.c.l.b16 %v225
      %v258 = vunpack.c.l.b16 %v226
      %v259 = vpack.c.b16 %v252, %v251
      %v260 = vpack.c.b16 %v254, %v253
      %v261 = vpack.c.b16 %v256, %v255
      %v262 = vpack.c.b16 %v258, %v257
      %v283 = vunpack.c.l.b16 %v227
      %v284 = vunpack.c.l.b16 %v228
      %v285 = vunpack.c.l.b16 %v229
      %v286 = vunpack.c.l.b16 %v230
      %v287 = vunpack.c.l.b16 %v231
      %v288 = vunpack.c.l.b16 %v232
      %v289 = vunpack.c.l.b16 %v233
      %v290 = vunpack.c.l.b16 %v234
      %v291 = vunpack.c.l.b16 %v235
      %v292 = vunpack.c.l.b16 %v236
      %v293 = vunpack.c.l.b16 %v237
      %v294 = vunpack.c.l.b16 %v238
      %v295 = vunpack.c.l.b16 %v239
      %v296 = vunpack.c.l.b16 %v240
      %v297 = vunpack.c.l.b16 %v241
      %v298 = vunpack.c.l.b16 %v242
      %v299 = vpack.c.b16 %v284, %v283
      %v300 = vpack.c.b16 %v286, %v285
      %v301 = vpack.c.b16 %v288, %v287
      %v302 = vpack.c.b16 %v290, %v289
      %v303 = vpack.c.b16 %v292, %v291
      %v304 = vpack.c.b16 %v294, %v293
      %v305 = vpack.c.b16 %v296, %v295
      %v306 = vpack.c.b16 %v298, %v297
      %315 = vmatprep.subr.bf16.mxu0 0
      %316 = vmatpush1.bf16.msra.mxu0 %v299
      %317 = vmatprep.subr.bf16.mxu0 0
      %318 = vmatpush1.bf16.msra.mxu0 %v300
      %319 = vmatprep.subr.bf16.mxu0 0
      %320 = vmatpush1.bf16.msra.mxu0 %v301
      %321 = vmatprep.subr.bf16.mxu0 0
      %322 = vmatpush1.bf16.msra.mxu0 %v302
      %323 = vmatprep.subr.bf16.mxu0 0
      %324 = vmatpush1.bf16.msra.mxu0 %v303
      %325 = vmatprep.subr.bf16.mxu0 0
      %326 = vmatpush1.bf16.msra.mxu0 %v304
      %327 = vmatprep.subr.bf16.mxu0 0
      %328 = vmatpush1.bf16.msra.mxu0 %v305
      %329 = vmatprep.subr.bf16.mxu0 0
      %330 = vmatpush1.bf16.msra.mxu0 %v306
      %331 = vmatprep.subr.bf16.mxu0 0
      %332 = vmatpush1.bf16.msra.mxu0 0
      %333 = vmatprep.subr.bf16.mxu0 0
      %334 = vmatpush1.bf16.msra.mxu0 0
      %335 = vmatprep.subr.bf16.mxu0 0
      %336 = vmatpush1.bf16.msra.mxu0 0
      %337 = vmatprep.subr.bf16.mxu0 0
      %338 = vmatpush1.bf16.msra.mxu0 0
      %339 = vmatprep.subr.bf16.mxu0 0
      %340 = vmatpush1.bf16.msra.mxu0 0
      %341 = vmatprep.subr.bf16.mxu0 0
      %342 = vmatpush1.bf16.msra.mxu0 0
      %343 = vmatprep.subr.bf16.mxu0 0
      %344 = vmatpush1.bf16.msra.mxu0 0
      %345 = vmatprep.subr.bf16.mxu0 0
      %346 = vmatpush1.bf16.msra.mxu0 0
      %347 = vmatprep.mubr.bf16.mxu0 0
      %348 = vmatmul.mubr.bf16.gmra.mrb[0].mxu0 %v259
      %v349 = vpop.f32.mrb[0].mxu0
      %v350 = vadd.f32 0.0, %v349
      %v351 = vpop.f32.mrb[0].mxu0
      %v352 = vpop.f32.mrb[0].mxu0
      %v353 = vadd.f32 0.0, %v352
      %v354 = vpop.f32.mrb[0].mxu0
      %355 = vmatprep.mubr.bf16.mxu0 0
      %356 = vmatmul.mubr.bf16.gmra.mrb[0].mxu0 %v260
      %v357 = vpop.f32.mrb[0].mxu0
      %v358 = vadd.f32 0.0, %v357
      %v359 = vpop.f32.mrb[0].mxu0
      %v360 = vpop.f32.mrb[0].mxu0
      %v361 = vadd.f32 0.0, %v360
      %v362 = vpop.f32.mrb[0].mxu0
      %363 = vmatprep.mubr.bf16.mxu0 0
      %364 = vmatmul.mubr.bf16.gmra.mrb[0].mxu0 %v261
      %v365 = vpop.f32.mrb[0].mxu0
      %v366 = vadd.f32 0.0, %v365
      %v367 = vpop.f32.mrb[0].mxu0
      %v368 = vpop.f32.mrb[0].mxu0
      %v369 = vadd.f32 0.0, %v368
      %v370 = vpop.f32.mrb[0].mxu0
      %371 = vmatprep.mubr.bf16.mxu0 0
      %372 = vmatmul.mubr.bf16.gmra.mrb[0].mxu0 %v262
      %v373 = vpop.f32.mrb[0].mxu0
      %v374 = vadd.f32 0.0, %v373
      %v375 = vpop.f32.mrb[0].mxu0
      %v376 = vpop.f32.mrb[0].mxu0
      %v377 = vadd.f32 0.0, %v376
      %v378 = vpop.f32.mrb[0].mxu0
      %379 = vdwg.mxu0
      %v380 = vpack.c.bf16 %v353, %v350
      %v381 = vpack.c.bf16 %v361, %v358
      %v382 = vpack.c.bf16 %v369, %v366
      %v383 = vpack.c.bf16 %v377, %v374
      %v388 = vunpack.c.l.b16 %v380
      %v389 = vunpack.c.h.b16 %v380
      %v390 = vunpack.c.l.b16 %v381
      %v391 = vunpack.c.h.b16 %v381
      %v392 = vunpack.c.l.b16 %v382
      %v393 = vunpack.c.h.b16 %v382
      %v394 = vunpack.c.l.b16 %v383
      %v395 = vunpack.c.h.b16 %v383
      %v396 = vpack.c.b16 %v388, %v388
      %v397 = vpack.c.b16 %v389, %v389
      %v398 = vpack.c.b16 %v390, %v390
      %v399 = vpack.c.b16 %v391, %v391
      %v400 = vpack.c.b16 %v392, %v392
      %v401 = vpack.c.b16 %v393, %v393
      %v402 = vpack.c.b16 %v394, %v394
      %v403 = vpack.c.b16 %v395, %v395
      %412 = vst [vmem:[%s210] sm:$0xf] %v396
      %413 = vst [vmem:[%s210 + $0x4] sm:$0xf] %v397
      %414 = vst [vmem:[%s210 + $0x8] sm:$0xf] %v398
      %415 = vst [vmem:[%s210 + $0xc] sm:$0xf] %v399
      %416 = vst [vmem:[%s210 + $0x10] sm:$0xf] %v400
      %417 = vst [vmem:[%s210 + $0x14] sm:$0xf] %v401
      %418 = vst [vmem:[%s210 + $0x18] sm:$0xf] %v402
      %419 = vst [vmem:[%s210 + $0x1c] sm:$0xf] %v403
      %v420 = vadd.f32 %v350, %v353
      %v421 = vadd.f32 %v420, %v358
      %v422 = vadd.f32 %v421, %v361
      %v423 = vadd.f32 %v422, %v366
      %v424 = vadd.f32 %v423, %v369
      %v425 = vadd.f32 %v424, %v374
      %v426 = vadd.f32 %v425, %v377
      %v427 = vrot.slane %v426, 4
      %v428 = vadd.f32 %v426, %v427
      %v429 = vrot.slane %v428, 2
      %v430 = vadd.f32 %v428, %v429
      %v431 = vrot.slane %v430, 1
      %v432 = vadd.f32 %v430, %v431
      %433 = vst [vmem:[%s214] sm:$0x1] %v432
      %v434 = vmul.f32 %v350, %v350
      %v435 = vmul.f32 %v353, %v353
      %v436 = vmul.f32 %v358, %v358
      %v437 = vmul.f32 %v361, %v361
      %v438 = vmul.f32 %v366, %v366
      %v439 = vmul.f32 %v369, %v369
      %v440 = vmul.f32 %v374, %v374
      %v441 = vmul.f32 %v377, %v377
      %v442 = vadd.f32 %v434, %v435
      %v443 = vadd.f32 %v442, %v436
      %v444 = vadd.f32 %v443, %v437
      %v445 = vadd.f32 %v444, %v438
      %v446 = vadd.f32 %v445, %v439
      %v447 = vadd.f32 %v446, %v440
      %v448 = vadd.f32 %v447, %v441
      %v449 = vrot.slane %v448, 4
      %v450 = vadd.f32 %v448, %v449
      %v451 = vrot.slane %v450, 2
      %v452 = vadd.f32 %v450, %v451
      %v453 = vrot.slane %v452, 1
      %v454 = vadd.f32 %v452, %v453
      %455 = vst [vmem:[%s217] sm:$0x1] %v454
      %s456 = smul.u32 8, %s16
      %p457 = scmp.lt.s32.totalorder %s456, 15
      %s458 = scalar_select %p457, %s456, 15
      %s459 = smul.addr %s458, 4
      %s460 = scalar_lea.vmem %s2, %s459
      %p461 = scmp.lt.s32.totalorder %s16, 1
      %s462 = scalar_select %p461, %s16, 1
      %s463 = scalar_lea.vmem %s3, %s462
      %p464 = scmp.lt.s32.totalorder %s16, 1
      %s465 = scalar_select %p464, %s16, 1
      %s466 = scalar_lea.vmem %s4, %s465
      // Predicated region
      $region29: #{basic_block_forward.3} parent=27 // pred_check
        %p467 = pneg %p81
      $region30: #{basic_block_forward.3} parent=27 // pred_check_branch
        %469 = sbr.rel (%p467) target = $region32
      $region31: #{basic_block_forward.3} parent=27 // pred_region
        %s470 = smul.u32 8, %s16
      $region32: #{basic_block_forward.3} parent=27 // pred_fallthru
        _
      // Predicated region
      $region33: #{basic_block_forward.3} parent=27 // pred_check
        %p471 = pneg %p107
      $region34: #{basic_block_forward.3} parent=27 // pred_check_branch
        %473 = sbr.rel (%p471) target = $region36
      $region35: #{basic_block_forward.3} parent=27 // pred_region
        _
      $region36: #{basic_block_forward.3} parent=27 // pred_fallthru
        _
      // Predicated region
      $region37: #{basic_block_forward.3} parent=27 // pred_check
        %p474 = pneg %p133
      $region38: #{basic_block_forward.3} parent=27 // pred_check_branch
        %476 = sbr.rel (%p474) target = $region40
      $region39: #{basic_block_forward.3} parent=27 // pred_region
        _
      $region40: #{basic_block_forward.3} parent=27 // pred_fallthru
        _
    $region28: #{basic_block_forward.3} parent=5 // pred_fallthru
      _
    %p477 = scmp.le.s32.totalorder 2, %s11
    // Predicated region
    $region41: #{basic_block_forward.3} parent=5 // pred_check
      %p478 = pneg %p477
    $region42: #{basic_block_forward.3} parent=5 // pred_check_branch
      %480 = sbr.rel (%p478) target = $region44
    $region43: #{basic_block_forward.3} parent=5 // pred_region
      %s481 = ssub.s32 %s11, 2
      // Predicated region
      $region45: #{basic_block_forward.3} parent=43 // pred_check
        %p482 = pneg %p87
      $region46: #{basic_block_forward.3} parent=43 // pred_check_branch
        %484 = sbr.rel (%p482) target = $region48
      $region47: #{basic_block_forward.3} parent=43 // pred_region
        %s485 = smul.u32 8, %s17
        %p486 = scmp.lt.s32.totalorder %s485, 15
        %s487 = scalar_select %p486, %s485, 15
        %s488 = smul.addr %s487, 4
        %s489 = scalar_lea.vmem %s2, %s488
      $region48: #{basic_block_forward.3} parent=43 // pred_fallthru
        _
      // Predicated region
      $region49: #{basic_block_forward.3} parent=43 // pred_check
        %p490 = pneg %p113
      $region50: #{basic_block_forward.3} parent=43 // pred_check_branch
        %492 = sbr.rel (%p490) target = $region52
      $region51: #{basic_block_forward.3} parent=43 // pred_region
        %p493 = scmp.lt.s32.totalorder %s17, 1
        %s494 = scalar_select %p493, %s17, 1
        %s495 = scalar_lea.vmem %s3, %s494
      $region52: #{basic_block_forward.3} parent=43 // pred_fallthru
        _
      // Predicated region
      $region53: #{basic_block_forward.3} parent=43 // pred_check
        %p496 = pneg %p139
      $region54: #{basic_block_forward.3} parent=43 // pred_check_branch
        %498 = sbr.rel (%p496) target = $region56
      $region55: #{basic_block_forward.3} parent=43 // pred_region
        %p499 = scmp.lt.s32.totalorder %s17, 1
        %s500 = scalar_select %p499, %s17, 1
        %s501 = scalar_lea.vmem %s4, %s500
      $region56: #{basic_block_forward.3} parent=43 // pred_fallthru
        _
    $region44: #{basic_block_forward.3} parent=5 // pred_fallthru
      _
  $region6: #{basic_block_forward.3} parent=0 // loop_footer
    %s15 = sadd.s32 1, %s11
  $region7: #{basic_block_forward.3} parent=0 // loop_footer_branch
    %10 = sbr.rel target = $region3
  $region8: #{basic_block_forward.3} parent=0 // loop_exit
    _

// kernel: tile.13
$region0: #{tile.13}
  #allocation0 [shape = 's32[1]{0}', space=sflag, size = 0x4, scoped, tag = 'scoped memory for tile.13']
  %s0 = inlined_call_operand.vmem [shape: f32[8], index: 0, kind: input, shape index: {}]
  %s1 = inlined_call_operand.vmem [shape: f32[9,8], index: 1, kind: output, shape index: {}]
  // Predicated region
  $region2: #{tile.13} parent=0 // pred_check
    _
  $region3: #{tile.13} parent=0 // pred_check_branch
    %3 = sbr.rel (0) target = $region5
  $region4: #{tile.13} parent=0 // pred_region
    _
  $region5: #{tile.13} parent=0 // pred_fallthru
    _
  %v4 = vld [vmem:[%s0] ss:$0 sm:$0xff]
  %5 = vst [vmem:[%s1] sm:$0xff] %v4
  %s6 = scalar_lea.vmem %s1, 8
  %7 = vst [vmem:[%s6] sm:$0xff] %v4

// kernel: tile.14
$region0: #{tile.14}
  %s0 = inlined_call_operand.vmem [shape: f32[9,8], index: 0, kind: input, shape index: {}]
  %s1 = inlined_call_operand.vmem [shape: f32[72], index: 1, kind: output, shape index: {}]
  $region1: #{tile.14} parent=0
    #allocation0 [shape = 'u8[4096]{0}', space=vmem, size = 0x1000, scoped, tag = 'scoped mem for output reshape']
    %v2 = vld [vmem:[%s0] sm:$0x1]
    %vm3 = vcmask 64512
    %4 = vst.msk [vmem:[#allocation0] sm:$0x1] %vm3, %v2
    %s5 = scalar_lea.vmem %s0, 8
    %v6 = vld [vmem:[%s5] sm:$0x1]
    %7 = vrot.lane.b32.xlu0 %v6, 64
    %v8 = vpop.permute.xlu0 %7
    %vm9 = vcmask 589312
    %10 = vst.msk [vmem:[#allocation0] sm:$0x1] %vm9, %v8
    %s11 = scalar_lea.vmem %s0, 7
    %v12 = vld [vmem:[%s11] sm:$0x1]
    %13 = vrot.lane.b32.xlu0 %v12, 56
    %v14 = vpop.permute.xlu0 %13
    %vm15 = vcmask 523712
    %16 = vst.msk [vmem:[#allocation0] sm:$0x1] %vm15, %v14
    %s17 = scalar_lea.vmem %s0, 6
    %v18 = vld [vmem:[%s17] sm:$0x1]
    %19 = vrot.lane.b32.xlu0 %v18, 48
    %v20 = vpop.permute.xlu0 %19
    %vm21 = vcmask 458112
    %22 = vst.msk [vmem:[#allocation0] sm:$0x1] %vm21, %v20
    %s23 = scalar_lea.vmem %s0, 5
    %v24 = vld [vmem:[%s23] sm:$0x1]
    %25 = vrot.lane.b32.xlu0 %v24, 40
    %v26 = vpop.permute.xlu0 %25
    %vm27 = vcmask 392512
    %28 = vst.msk [vmem:[#allocation0] sm:$0x1] %vm27, %v26
    %s29 = scalar_lea.vmem %s0, 4
    %v30 = vld [vmem:[%s29] sm:$0x1]
    %31 = vrot.lane.b32.xlu0 %v30, 32
    %v32 = vpop.permute.xlu0 %31
    %vm33 = vcmask 326912
    %34 = vst.msk [vmem:[#allocation0] sm:$0x1] %vm33, %v32
    %s35 = scalar_lea.vmem %s0, 3
    %v36 = vld [vmem:[%s35] sm:$0x1]
    %37 = vrot.lane.b32.xlu0 %v36, 24
    %v38 = vpop.permute.xlu0 %37
    %vm39 = vcmask 261312
    %40 = vst.msk [vmem:[#allocation0] sm:$0x1] %vm39, %v38
    %s41 = scalar_lea.vmem %s0, 2
    %v42 = vld [vmem:[%s41] sm:$0x1]
    %43 = vrot.lane.b32.xlu0 %v42, 16
    %v44 = vpop.permute.xlu0 %43
    %vm45 = vcmask 195712
    %46 = vst.msk [vmem:[#allocation0] sm:$0x1] %vm45, %v44
    %s47 = scalar_lea.vmem %s0, 1
    %v48 = vld [vmem:[%s47] sm:$0x1]
    %49 = vrot.lane.b32.xlu0 %v48, 8
    %v50 = vpop.permute.xlu0 %49
    %vm51 = vcmask 130112
    %52 = vst.msk [vmem:[#allocation0] sm:$0x1] %vm51, %v50
    %s54 = sshllo.u32 0, 1
    %v56 = vld [vmem:[#allocation0] sm:%s54]
    %s57 = sshllo.u32 0, 1
    %58 = vst [vmem:[%s1] sm:%s57] %v56

// kernel: basic_block_forward.5
$region0: #{basic_block_forward.5}
  #allocation0 [shape = 'u32[]', space=smem, size = 0x4, offset = 0x4, fixed_abs, tag = 'smem constant byte address 0x4 - core index']
  #allocation1 [shape = 'u32[144,128]{1,0:T(1,128)}', space=vmem, size = 0x12000, scoped, tag = 'internal scratch']
  %s0 = inlined_call_operand.vmem [shape: bf16[128,128], index: 0, kind: input, shape index: {}]
  %s1 = inlined_call_operand.vmem [shape: bf16[128,128], index: 1, kind: input, shape index: {}]
  %s2 = inlined_call_operand.vmem [shape: f32[1,128], index: 2, kind: input, shape index: {}]
  %s3 = inlined_call_operand.vmem [shape: f32[1,128], index: 3, kind: input, shape index: {}]
  %s4 = inlined_call_operand.vmem [shape: f32[1,128], index: 4, kind: input, shape index: {}]
  %s5 = inlined_call_operand.vmem [shape: f32[1,128], index: 5, kind: input, shape index: {}]
  %s6 = inlined_call_operand.vmem [shape: f32[128,128], index: 6, kind: output, shape index: {}]
  %s7 = sld [smem:[#allocation0]]
  $region57: #{basic_block_forward.5} parent=0
    _
  %s9 = ssub.s32 1, %s7
  %s10 = scalar_select 0, %s9, %s7
  loop: start=0, step=1, limit=4
  $region2: #{basic_block_forward.5} parent=0 // loop_pre_header
    _
  $region3: #{basic_block_forward.5} parent=0 // loop_header
    %s12 = sphi 0, %s16
    %p13 = scmp.ge.s32.totalorder %s12, 4
    %s22 = sphi 0, %s24
    %s25 = sphi 0, %s22
    %s26 = sphi 0, %s25
    %s42 = sphi 0, %s26
    %s48 = sphi 0, %s50
    %s51 = sphi 0, %s48
    %s52 = sphi 0, %s51
    %s68 = sphi 0, %s52
    %s72 = sphi 0, %s72
    %s74 = sphi 0, %s72
    %s75 = sphi 0, %s74
    %s89 = sphi 0, %s75
    %s93 = sphi 0, %s93
    %s95 = sphi 0, %s93
    %s96 = sphi 0, %s95
    %s110 = sphi 0, %s96
    %s114 = sphi 0, %s114
    %s116 = sphi 0, %s114
    %s117 = sphi 0, %s116
    %s131 = sphi 0, %s117
    %s135 = sphi 0, %s135
    %s137 = sphi 0, %s135
    %s138 = sphi 0, %s137
    %s152 = sphi 0, %s138
    %s158 = sphi 0, %s160
    %s161 = sphi 0, %s158
    %s162 = sphi 0, %s161
    %s178 = sphi 0, %s162
  $region4: #{basic_block_forward.5} parent=0 // loop_header_branch
    %15 = sbr.rel (%p13) target = $region8
  $region5: #{basic_block_forward.5} parent=0 // loop_body
    %s17 = ssub.s32 %s12, 1
    %s18 = ssub.s32 %s12, 2
    %s19 = sadd.s32 %s12, 1
    %s20 = ssub.s32 %s12, %s19
    %p21 = scmp.eq.s32.totalorder %s20, 0
    %s23 = sadd.s32 %s22, 1
    %s24 = scalar_select %p21, %s22, %s23
    %p27 = pneg %p21
    %p28 = scmp.eq.s32.totalorder %s12, 1
    %p29 = por %p27, %p28
    %p30 = scmp.ne.s32.totalorder %s22, %s25
    %p31 = scmp.eq.s32.totalorder %s12, 0
    %p32 = por %p30, %p31
    %p33 = scmp.ne.s32.totalorder %s22, %s25
    %p34 = scmp.eq.s32.totalorder %s17, 1
    %p35 = por %p33, %p34
    %p36 = scmp.ne.s32.totalorder %s25, %s26
    %p37 = scmp.eq.s32.totalorder %s17, 0
    %p38 = por %p36, %p37
    %p39 = scmp.ne.s32.totalorder %s25, %s26
    %p40 = scmp.eq.s32.totalorder %s18, 1
    %p41 = por %p39, %p40
    %p43 = scmp.ne.s32.totalorder %s26, %s42
    %p44 = scmp.eq.s32.totalorder %s18, 0
    %p45 = por %p43, %p44
    %s46 = ssub.s32 %s12, %s19
    %p47 = scmp.eq.s32.totalorder %s46, 0
    %s49 = sadd.s32 %s48, 1
    %s50 = scalar_select %p47, %s48, %s49
    %p53 = pneg %p47
    %p54 = scmp.eq.s32.totalorder %s12, 1
    %p55 = por %p53, %p54
    %p56 = scmp.ne.s32.totalorder %s48, %s51
    %p57 = scmp.eq.s32.totalorder %s12, 0
    %p58 = por %p56, %p57
    %p59 = scmp.ne.s32.totalorder %s48, %s51
    %p60 = scmp.eq.s32.totalorder %s17, 1
    %p61 = por %p59, %p60
    %p62 = scmp.ne.s32.totalorder %s51, %s52
    %p63 = scmp.eq.s32.totalorder %s17, 0
    %p64 = por %p62, %p63
    %p65 = scmp.ne.s32.totalorder %s51, %s52
    %p66 = scmp.eq.s32.totalorder %s18, 1
    %p67 = por %p65, %p66
    %p69 = scmp.ne.s32.totalorder %s52, %s68
    %p70 = scmp.eq.s32.totalorder %s18, 0
    %p71 = por %p69, %p70
    %s73 = sadd.s32 %s72, 1
    %p76 = scmp.eq.s32.totalorder %s12, 1
    %p77 = scmp.ne.s32.totalorder %s72, %s74
    %p78 = scmp.eq.s32.totalorder %s12, 0
    %p79 = por %p77, %p78
    %p80 = scmp.ne.s32.totalorder %s72, %s74
    %p81 = scmp.eq.s32.totalorder %s17, 1
    %p82 = por %p80, %p81
    %p83 = scmp.ne.s32.totalorder %s74, %s75
    %p84 = scmp.eq.s32.totalorder %s17, 0
    %p85 = por %p83, %p84
    %p86 = scmp.ne.s32.totalorder %s74, %s75
    %p87 = scmp.eq.s32.totalorder %s18, 1
    %p88 = por %p86, %p87
    %p90 = scmp.ne.s32.totalorder %s75, %s89
    %p91 = scmp.eq.s32.totalorder %s18, 0
    %p92 = por %p90, %p91
    %s94 = sadd.s32 %s93, 1
    %p97 = scmp.eq.s32.totalorder %s12, 1
    %p98 = scmp.ne.s32.totalorder %s93, %s95
    %p99 = scmp.eq.s32.totalorder %s12, 0
    %p100 = por %p98, %p99
    %p101 = scmp.ne.s32.totalorder %s93, %s95
    %p102 = scmp.eq.s32.totalorder %s17, 1
    %p103 = por %p101, %p102
    %p104 = scmp.ne.s32.totalorder %s95, %s96
    %p105 = scmp.eq.s32.totalorder %s17, 0
    %p106 = por %p104, %p105
    %p107 = scmp.ne.s32.totalorder %s95, %s96
    %p108 = scmp.eq.s32.totalorder %s18, 1
    %p109 = por %p107, %p108
    %p111 = scmp.ne.s32.totalorder %s96, %s110
    %p112 = scmp.eq.s32.totalorder %s18, 0
    %p113 = por %p111, %p112
    %s115 = sadd.s32 %s114, 1
    %p118 = scmp.eq.s32.totalorder %s12, 1
    %p119 = scmp.ne.s32.totalorder %s114, %s116
    %p120 = scmp.eq.s32.totalorder %s12, 0
    %p121 = por %p119, %p120
    %p122 = scmp.ne.s32.totalorder %s114, %s116
    %p123 = scmp.eq.s32.totalorder %s17, 1
    %p124 = por %p122, %p123
    %p125 = scmp.ne.s32.totalorder %s116, %s117
    %p126 = scmp.eq.s32.totalorder %s17, 0
    %p127 = por %p125, %p126
    %p128 = scmp.ne.s32.totalorder %s116, %s117
    %p129 = scmp.eq.s32.totalorder %s18, 1
    %p130 = por %p128, %p129
    %p132 = scmp.ne.s32.totalorder %s117, %s131
    %p133 = scmp.eq.s32.totalorder %s18, 0
    %p134 = por %p132, %p133
    %s136 = sadd.s32 %s135, 1
    %p139 = scmp.eq.s32.totalorder %s12, 1
    %p140 = scmp.ne.s32.totalorder %s135, %s137
    %p141 = scmp.eq.s32.totalorder %s12, 0
    %p142 = por %p140, %p141
    %p143 = scmp.ne.s32.totalorder %s135, %s137
    %p144 = scmp.eq.s32.totalorder %s17, 1
    %p145 = por %p143, %p144
    %p146 = scmp.ne.s32.totalorder %s137, %s138
    %p147 = scmp.eq.s32.totalorder %s17, 0
    %p148 = por %p146, %p147
    %p149 = scmp.ne.s32.totalorder %s137, %s138
    %p150 = scmp.eq.s32.totalorder %s18, 1
    %p151 = por %p149, %p150
    %p153 = scmp.ne.s32.totalorder %s138, %s152
    %p154 = scmp.eq.s32.totalorder %s18, 0
    %p155 = por %p153, %p154
    %s156 = ssub.s32 %s12, %s19
    %p157 = scmp.eq.s32.totalorder %s156, 0
    %s159 = sadd.s32 %s158, 1
    %s160 = scalar_select %p157, %s158, %s159
    %p163 = pneg %p157
    %p164 = scmp.eq.s32.totalorder %s12, 1
    %p165 = por %p163, %p164
    %p166 = scmp.ne.s32.totalorder %s158, %s161
    %p167 = scmp.eq.s32.totalorder %s12, 0
    %p168 = por %p166, %p167
    %p169 = scmp.ne.s32.totalorder %s158, %s161
    %p170 = scmp.eq.s32.totalorder %s17, 1
    %p171 = por %p169, %p170
    %p172 = scmp.ne.s32.totalorder %s161, %s162
    %p173 = scmp.eq.s32.totalorder %s17, 0
    %p174 = por %p172, %p173
    %p175 = scmp.ne.s32.totalorder %s161, %s162
    %p176 = scmp.eq.s32.totalorder %s18, 1
    %p177 = por %p175, %p176
    %p179 = scmp.ne.s32.totalorder %s162, %s178
    %p180 = scmp.eq.s32.totalorder %s18, 0
    %p181 = por %p179, %p180
    %p182 = scmp.le.s32.totalorder 1, %s12
    %p183 = scmp.lt.s32.totalorder %s12, 3
    %p184 = pnand %p182, %p183
    %p185 = pneg %p184
    // Predicated region
    $region9: #{basic_block_forward.5} parent=5 // pred_check
      _
    $region10: #{basic_block_forward.5} parent=5 // pred_check_branch
      %187 = sbr.rel (%p184) target = $region12
    $region11: #{basic_block_forward.5} parent=5 // pred_region
      %s188 = ssub.s32 %s12, 1
      // Predicated region
      $region13: #{basic_block_forward.5} parent=11 // pred_check
        %p189 = pneg %p85
      $region14: #{basic_block_forward.5} parent=11 // pred_check_branch
        %191 = sbr.rel (%p189) target = $region16
      $region15: #{basic_block_forward.5} parent=11 // pred_region
        _
      $region16: #{basic_block_forward.5} parent=11 // pred_fallthru
        _
      // Predicated region
      $region17: #{basic_block_forward.5} parent=11 // pred_check
        %p192 = pneg %p106
      $region18: #{basic_block_forward.5} parent=11 // pred_check_branch
        %194 = sbr.rel (%p192) target = $region20
      $region19: #{basic_block_forward.5} parent=11 // pred_region
        _
      $region20: #{basic_block_forward.5} parent=11 // pred_fallthru
        _
      // Predicated region
      $region21: #{basic_block_forward.5} parent=11 // pred_check
        %p195 = pneg %p127
      $region22: #{basic_block_forward.5} parent=11 // pred_check_branch
        %197 = sbr.rel (%p195) target = $region24
      $region23: #{basic_block_forward.5} parent=11 // pred_region
        _
      $region24: #{basic_block_forward.5} parent=11 // pred_fallthru
        _
      // Predicated region
      $region25: #{basic_block_forward.5} parent=11 // pred_check
        %p198 = pneg %p148
      $region26: #{basic_block_forward.5} parent=11 // pred_check_branch
        %200 = sbr.rel (%p198) target = $region28
      $region27: #{basic_block_forward.5} parent=11 // pred_region
        _
      $region28: #{basic_block_forward.5} parent=11 // pred_fallthru
        _
    $region12: #{basic_block_forward.5} parent=5 // pred_fallthru
      _
    %p201 = scmp.lt.s32.totalorder %s12, 2
    // Predicated region
    $region29: #{basic_block_forward.5} parent=5 // pred_check
      %p202 = pneg %p201
    $region30: #{basic_block_forward.5} parent=5 // pred_check_branch
      %204 = sbr.rel (%p202) target = $region32
    $region31: #{basic_block_forward.5} parent=5 // pred_region
      // Predicated region
      $region33: #{basic_block_forward.5} parent=31 // pred_check
        %p205 = pneg %p32
      $region34: #{basic_block_forward.5} parent=31 // pred_check_branch
        %207 = sbr.rel (%p205) target = $region36
      $region35: #{basic_block_forward.5} parent=31 // pred_region
        %s208 = smul.u32 8, %s12
        %p209 = scmp.lt.s32.totalorder %s208, 15
        %s210 = scalar_select %p209, %s208, 15
        %s211 = smul.addr %s210, 4
        %s212 = scalar_lea.vmem %s0, %s211
        %s213 = smul.u32 8, %s12
      $region36: #{basic_block_forward.5} parent=31 // pred_fallthru
        _
      // Predicated region
      $region37: #{basic_block_forward.5} parent=31 // pred_check
        %p214 = pneg %p58
      $region38: #{basic_block_forward.5} parent=31 // pred_check_branch
        %216 = sbr.rel (%p214) target = $region40
      $region39: #{basic_block_forward.5} parent=31 // pred_region
        %s217 = smul.u32 8, %s12
        %p218 = scmp.lt.s32.totalorder %s217, 15
        %s219 = scalar_select %p218, %s217, 15
        %s220 = smul.addr %s219, 4
        %s221 = scalar_lea.vmem %s1, %s220
        %s222 = smul.u32 8, %s12
      $region40: #{basic_block_forward.5} parent=31 // pred_fallthru
        _
    $region32: #{basic_block_forward.5} parent=5 // pred_fallthru
      _
    %p223 = scmp.le.s32.totalorder 1, %s12
    %p224 = scmp.lt.s32.totalorder %s12, 3
    %p225 = pnand %p223, %p224
    %p226 = pneg %p225
    // Predicated region
    $region41: #{basic_block_forward.5} parent=5 // pred_check
      _
    $region42: #{basic_block_forward.5} parent=5 // pred_check_branch
      %228 = sbr.rel (%p225) target = $region44
    $region43: #{basic_block_forward.5} parent=5 // pred_region
      %s229 = ssub.s32 %s12, 1
      %s230 = smul.u32 8, %s17
      %p231 = scmp.lt.s32.totalorder %s230, 15
      %s232 = scalar_select %p231, %s230, 15
      %s233 = smul.addr %s232, 4
      %s234 = scalar_lea.vmem %s0, %s233
      %p235 = pneg %p38
      %p236 = pneg %p35
      %s237 = smul.u32 8, %s17
      %p238 = scmp.lt.s32.totalorder %s237, 15
      %s239 = scalar_select %p238, %s237, 15
      %s240 = smul.addr %s239, 4
      %s241 = scalar_lea.vmem %s1, %s240
      %p242 = pneg %p64
      %p243 = pneg %p61
      %p244 = pneg %p85
      %p245 = pneg %p82
      %p246 = pneg %p106
      %p247 = pneg %p103
      %p248 = pneg %p127
      %p249 = pneg %p124
      %p250 = pneg %p148
      %p251 = pneg %p145
      %p252 = pneg %p174
      %p253 = pneg %p171
      %s254 = smul.u32 8, %s17
      %p255 = scmp.lt.s32.totalorder %s254, 15
      %s256 = scalar_select %p255, %s254, 15
      %s257 = smul.addr %s256, 8
      %s258 = scalar_lea.vmem %s6, %s257
      %s259 = smul.u32 8, %s17
      %p260 = scmp.lt.s32.totalorder %s259, 15
      %s261 = scalar_select %p260, %s259, 15
      %s262 = smul.addr %s261, 4
      %s263 = scalar_lea.vmem %s0, %s262
      %s264 = smul.u32 8, %s17
      %s265 = smul.u32 8, %s17
      %p266 = scmp.lt.s32.totalorder %s265, 15
      %s267 = scalar_select %p266, %s265, 15
      %s268 = smul.addr %s267, 4
      %s269 = scalar_lea.vmem %s1, %s268
      %s270 = smul.u32 8, %s17
      %s271 = smul.u32 8, %s17
      %p272 = scmp.lt.s32.totalorder %s271, 15
      %s273 = scalar_select %p272, %s271, 15
      %s274 = smul.addr %s273, 8
      %s275 = scalar_lea.vmem %s6, %s274
      %s276 = smul.u32 8, %s17
      %v277 = vld [vmem:[%s263] sm:$0xf]
      %v278 = vld [vmem:[%s263 + $0x4] sm:$0xf]
      %v279 = vld [vmem:[%s263 + $0x8] sm:$0xf]
      %v280 = vld [vmem:[%s263 + $0xc] sm:$0xf]
      %v281 = vld [vmem:[%s263 + $0x10] sm:$0xf]
      %v282 = vld [vmem:[%s263 + $0x14] sm:$0xf]
      %v283 = vld [vmem:[%s263 + $0x18] sm:$0xf]
      %v284 = vld [vmem:[%s263 + $0x1c] sm:$0xf]
      %v285 = vunpack.c.l.bf16 %v277
      %v286 = vunpack.c.l.bf16 %v278
      %v287 = vunpack.c.l.bf16 %v279
      %v288 = vunpack.c.l.bf16 %v280
      %v289 = vunpack.c.l.bf16 %v281
      %v290 = vunpack.c.l.bf16 %v282
      %v291 = vunpack.c.l.bf16 %v283
      %v292 = vunpack.c.l.bf16 %v284
      %v293 = vld [vmem:[%s2] sm:$0x1]
      %v295 = vlaneseq
      %v296 = vshrl.u32 %v295, 7
      %v297 = vsub.s32 0, %v296
      %v298 = vrot.slane %v293, %v297
      %v300 = vmul.f32 %v285, %v298
      %v301 = vmul.f32 %v286, %v298
      %v302 = vmul.f32 %v287, %v298
      %v303 = vmul.f32 %v288, %v298
      %v304 = vmul.f32 %v289, %v298
      %v305 = vmul.f32 %v290, %v298
      %v306 = vmul.f32 %v291, %v298
      %v307 = vmul.f32 %v292, %v298
      %v308 = vld [vmem:[%s3] sm:$0x1]
      %v310 = vlaneseq
      %v311 = vshrl.u32 %v310, 7
      %v312 = vsub.s32 0, %v311
      %v313 = vrot.slane %v308, %v312
      %v315 = vadd.f32 %v300, %v313
      %v316 = vadd.f32 %v301, %v313
      %v317 = vadd.f32 %v302, %v313
      %v318 = vadd.f32 %v303, %v313
      %v319 = vadd.f32 %v304, %v313
      %v320 = vadd.f32 %v305, %v313
      %v321 = vadd.f32 %v306, %v313
      %v322 = vadd.f32 %v307, %v313
      %v323 = vld [vmem:[%s269] sm:$0xf]
      %v324 = vld [vmem:[%s269 + $0x4] sm:$0xf]
      %v325 = vld [vmem:[%s269 + $0x8] sm:$0xf]
      %v326 = vld [vmem:[%s269 + $0xc] sm:$0xf]
      %v327 = vld [vmem:[%s269 + $0x10] sm:$0xf]
      %v328 = vld [vmem:[%s269 + $0x14] sm:$0xf]
      %v329 = vld [vmem:[%s269 + $0x18] sm:$0xf]
      %v330 = vld [vmem:[%s269 + $0x1c] sm:$0xf]
      %v331 = vunpack.c.l.bf16 %v323
      %v332 = vunpack.c.l.bf16 %v324
      %v333 = vunpack.c.l.bf16 %v325
      %v334 = vunpack.c.l.bf16 %v326
      %v335 = vunpack.c.l.bf16 %v327
      %v336 = vunpack.c.l.bf16 %v328
      %v337 = vunpack.c.l.bf16 %v329
      %v338 = vunpack.c.l.bf16 %v330
      %v339 = vld [vmem:[%s4] sm:$0x1]
      %v341 = vlaneseq
      %v342 = vshrl.u32 %v341, 7
      %v343 = vsub.s32 0, %v342
      %v344 = vrot.slane %v339, %v343
      %v346 = vmul.f32 %v331, %v344
      %v347 = vmul.f32 %v332, %v344
      %v348 = vmul.f32 %v333, %v344
      %v349 = vmul.f32 %v334, %v344
      %v350 = vmul.f32 %v335, %v344
      %v351 = vmul.f32 %v336, %v344
      %v352 = vmul.f32 %v337, %v344
      %v353 = vmul.f32 %v338, %v344
      %v354 = vld [vmem:[%s5] sm:$0x1]
      %v356 = vlaneseq
      %v357 = vshrl.u32 %v356, 7
      %v358 = vsub.s32 0, %v357
      %v359 = vrot.slane %v354, %v358
      %v361 = vadd.f32 %v346, %v359
      %v362 = vadd.f32 %v347, %v359
      %v363 = vadd.f32 %v348, %v359
      %v364 = vadd.f32 %v349, %v359
      %v365 = vadd.f32 %v350, %v359
      %v366 = vadd.f32 %v351, %v359
      %v367 = vadd.f32 %v352, %v359
      %v368 = vadd.f32 %v353, %v359
      %v369 = vadd.f32 %v315, %v361
      %v370 = vadd.f32 %v316, %v362
      %v371 = vadd.f32 %v317, %v363
      %v372 = vadd.f32 %v318, %v364
      %v373 = vadd.f32 %v319, %v365
      %v374 = vadd.f32 %v320, %v366
      %v375 = vadd.f32 %v321, %v367
      %v376 = vadd.f32 %v322, %v368
      %v377 = vmax.f32 %v369, 0.0
      %v378 = vmax.f32 %v370, 0.0
      %v379 = vmax.f32 %v371, 0.0
      %v380 = vmax.f32 %v372, 0.0
      %v381 = vmax.f32 %v373, 0.0
      %v382 = vmax.f32 %v374, 0.0
      %v383 = vmax.f32 %v375, 0.0
      %v384 = vmax.f32 %v376, 0.0
      %385 = vst [vmem:[%s275] sm:$0xff] %v377
      %386 = vst [vmem:[%s275 + $0x8] sm:$0xff] %v378
      %387 = vst [vmem:[%s275 + $0x10] sm:$0xff] %v379
      %388 = vst [vmem:[%s275 + $0x18] sm:$0xff] %v380
      %389 = vst [vmem:[%s275 + $0x20] sm:$0xff] %v381
      %390 = vst [vmem:[%s275 + $0x28] sm:$0xff] %v382
      %391 = vst [vmem:[%s275 + $0x30] sm:$0xff] %v383
      %392 = vst [vmem:[%s275 + $0x38] sm:$0xff] %v384
      %s393 = smul.u32 8, %s17
      %p394 = scmp.lt.s32.totalorder %s393, 15
      %s395 = scalar_select %p394, %s393, 15
      %s396 = smul.addr %s395, 8
      %s397 = scalar_lea.vmem %s6, %s396
      // Predicated region
      $region45: #{basic_block_forward.5} parent=43 // pred_check
        %p398 = pneg %p171
      $region46: #{basic_block_forward.5} parent=43 // pred_check_branch
        %400 = sbr.rel (%p398) target = $region48
      $region47: #{basic_block_forward.5} parent=43 // pred_region
        %s401 = smul.u32 8, %s17
      $region48: #{basic_block_forward.5} parent=43 // pred_fallthru
        _
    $region44: #{basic_block_forward.5} parent=5 // pred_fallthru
      _
    %p402 = scmp.le.s32.totalorder 2, %s12
    // Predicated region
    $region49: #{basic_block_forward.5} parent=5 // pred_check
      %p403 = pneg %p402
    $region50: #{basic_block_forward.5} parent=5 // pred_check_branch
      %405 = sbr.rel (%p403) target = $region52
    $region51: #{basic_block_forward.5} parent=5 // pred_region
      %s406 = ssub.s32 %s12, 2
      // Predicated region
      $region53: #{basic_block_forward.5} parent=51 // pred_check
        %p407 = pneg %p177
      $region54: #{basic_block_forward.5} parent=51 // pred_check_branch
        %409 = sbr.rel (%p407) target = $region56
      $region55: #{basic_block_forward.5} parent=51 // pred_region
        %s410 = smul.u32 8, %s18
        %p411 = scmp.lt.s32.totalorder %s410, 15
        %s412 = scalar_select %p411, %s410, 15
        %s413 = smul.addr %s412, 8
        %s414 = scalar_lea.vmem %s6, %s413
      $region56: #{basic_block_forward.5} parent=51 // pred_fallthru
        _
    $region52: #{basic_block_forward.5} parent=5 // pred_fallthru
      _
  $region6: #{basic_block_forward.5} parent=0 // loop_footer
    %s16 = sadd.s32 1, %s12
  $region7: #{basic_block_forward.5} parent=0 // loop_footer_branch
    %11 = sbr.rel target = $region3
  $region8: #{basic_block_forward.5} parent=0 // loop_exit
    _

// kernel: basic_block_forward.4
$region0: #{basic_block_forward.4}
  #allocation0 [shape = 'u32[]', space=smem, size = 0x4, offset = 0x4, fixed_abs, tag = 'smem constant byte address 0x4 - core index']
  #allocation1 [shape = 'u32[144,128]{1,0:T(1,128)}', space=vmem, size = 0x12000, scoped, tag = 'internal scratch']
  %s0 = inlined_call_operand.vmem [shape: bf16[128,128], index: 0, kind: input, shape index: {}]
  %s1 = inlined_call_operand.vmem [shape: f32[1,128], index: 1, kind: input, shape index: {}]
  %s2 = inlined_call_operand.vmem [shape: f32[1,128], index: 2, kind: input, shape index: {}]
  %s3 = inlined_call_operand.vmem [shape: bf16[128,128], index: 3, kind: input, shape index: {}]
  %s4 = inlined_call_operand.vmem [shape: bf16[128,128], index: 4, kind: input, shape index: {}]
  %s5 = inlined_call_operand.vmem [shape: bf16[128,128], index: 5, kind: input, shape index: {}]
  %s6 = inlined_call_operand.vmem [shape: bf16[128,128], index: 6, kind: output, shape index: {0}]
  %s7 = inlined_call_operand.vmem [shape: bf16[128,128], index: 7, kind: output, shape index: {1}]
  %s8 = inlined_call_operand.vmem [shape: f32[2,1,128], index: 8, kind: output, shape index: {2}]
  %s9 = inlined_call_operand.vmem [shape: f32[2,1,128], index: 9, kind: output, shape index: {3}]
  %s10 = inlined_call_operand.vmem [shape: f32[2,1,128], index: 10, kind: output, shape index: {4}]
  %s11 = inlined_call_operand.vmem [shape: f32[2,1,128], index: 11, kind: output, shape index: {5}]
  %12 = xla_tuple %s6, %s7, %s8, %s9, %s10, %s11
  %s13 = sld [smem:[#allocation0]]
  $region97: #{basic_block_forward.4} parent=0
    _
  %s15 = ssub.s32 1, %s13
  %s16 = scalar_select 0, %s15, %s13
  loop: start=0, step=1, limit=4
  $region2: #{basic_block_forward.4} parent=0 // loop_pre_header
    _
  $region3: #{basic_block_forward.4} parent=0 // loop_header
    %s18 = sphi 0, %s22
    %p19 = scmp.ge.s32.totalorder %s18, 4
    %s28 = sphi 0, %s30
    %s31 = sphi 0, %s28
    %s32 = sphi 0, %s31
    %s48 = sphi 0, %s32
    %s52 = sphi 0, %s52
    %s54 = sphi 0, %s52
    %s55 = sphi 0, %s54
    %s69 = sphi 0, %s55
    %s73 = sphi 0, %s73
    %s75 = sphi 0, %s73
    %s76 = sphi 0, %s75
    %s90 = sphi 0, %s76
    %s94 = sphi 0, %s94
    %s96 = sphi 0, %s94
    %s97 = sphi 0, %s96
    %s111 = sphi 0, %s97
    %s117 = sphi 0, %s119
    %s120 = sphi 0, %s117
    %s121 = sphi 0, %s120
    %s137 = sphi 0, %s121
    %s141 = sphi 0, %s141
    %s143 = sphi 0, %s141
    %s144 = sphi 0, %s143
    %s158 = sphi 0, %s144
    %s164 = sphi 0, %s166
    %s167 = sphi 0, %s164
    %s168 = sphi 0, %s167
    %s184 = sphi 0, %s168
    %s190 = sphi 0, %s192
    %s193 = sphi 0, %s190
    %s194 = sphi 0, %s193
    %s210 = sphi 0, %s194
    %s216 = sphi 0, %s218
    %s219 = sphi 0, %s216
    %s220 = sphi 0, %s219
    %s236 = sphi 0, %s220
    %s242 = sphi 0, %s244
    %s245 = sphi 0, %s242
    %s246 = sphi 0, %s245
    %s262 = sphi 0, %s246
    %s268 = sphi 0, %s270
    %s271 = sphi 0, %s268
    %s272 = sphi 0, %s271
    %s288 = sphi 0, %s272
    %s294 = sphi 0, %s296
    %s297 = sphi 0, %s294
    %s298 = sphi 0, %s297
    %s314 = sphi 0, %s298
  $region4: #{basic_block_forward.4} parent=0 // loop_header_branch
    %21 = sbr.rel (%p19) target = $region8
  $region5: #{basic_block_forward.4} parent=0 // loop_body
    %s23 = ssub.s32 %s18, 1
    %s24 = ssub.s32 %s18, 2
    %s25 = sadd.s32 %s18, 1
    %s26 = ssub.s32 %s18, %s25
    %p27 = scmp.eq.s32.totalorder %s26, 0
    %s29 = sadd.s32 %s28, 1
    %s30 = scalar_select %p27, %s28, %s29
    %p33 = pneg %p27
    %p34 = scmp.eq.s32.totalorder %s18, 1
    %p35 = por %p33, %p34
    %p36 = scmp.ne.s32.totalorder %s28, %s31
    %p37 = scmp.eq.s32.totalorder %s18, 0
    %p38 = por %p36, %p37
    %p39 = scmp.ne.s32.totalorder %s28, %s31
    %p40 = scmp.eq.s32.totalorder %s23, 1
    %p41 = por %p39, %p40
    %p42 = scmp.ne.s32.totalorder %s31, %s32
    %p43 = scmp.eq.s32.totalorder %s23, 0
    %p44 = por %p42, %p43
    %p45 = scmp.ne.s32.totalorder %s31, %s32
    %p46 = scmp.eq.s32.totalorder %s24, 1
    %p47 = por %p45, %p46
    %p49 = scmp.ne.s32.totalorder %s32, %s48
    %p50 = scmp.eq.s32.totalorder %s24, 0
    %p51 = por %p49, %p50
    %s53 = sadd.s32 %s52, 1
    %p56 = scmp.eq.s32.totalorder %s18, 1
    %p57 = scmp.ne.s32.totalorder %s52, %s54
    %p58 = scmp.eq.s32.totalorder %s18, 0
    %p59 = por %p57, %p58
    %p60 = scmp.ne.s32.totalorder %s52, %s54
    %p61 = scmp.eq.s32.totalorder %s23, 1
    %p62 = por %p60, %p61
    %p63 = scmp.ne.s32.totalorder %s54, %s55
    %p64 = scmp.eq.s32.totalorder %s23, 0
    %p65 = por %p63, %p64
    %p66 = scmp.ne.s32.totalorder %s54, %s55
    %p67 = scmp.eq.s32.totalorder %s24, 1
    %p68 = por %p66, %p67
    %p70 = scmp.ne.s32.totalorder %s55, %s69
    %p71 = scmp.eq.s32.totalorder %s24, 0
    %p72 = por %p70, %p71
    %s74 = sadd.s32 %s73, 1
    %p77 = scmp.eq.s32.totalorder %s18, 1
    %p78 = scmp.ne.s32.totalorder %s73, %s75
    %p79 = scmp.eq.s32.totalorder %s18, 0
    %p80 = por %p78, %p79
    %p81 = scmp.ne.s32.totalorder %s73, %s75
    %p82 = scmp.eq.s32.totalorder %s23, 1
    %p83 = por %p81, %p82
    %p84 = scmp.ne.s32.totalorder %s75, %s76
    %p85 = scmp.eq.s32.totalorder %s23, 0
    %p86 = por %p84, %p85
    %p87 = scmp.ne.s32.totalorder %s75, %s76
    %p88 = scmp.eq.s32.totalorder %s24, 1
    %p89 = por %p87, %p88
    %p91 = scmp.ne.s32.totalorder %s76, %s90
    %p92 = scmp.eq.s32.totalorder %s24, 0
    %p93 = por %p91, %p92
    %s95 = sadd.s32 %s94, 1
    %p98 = scmp.eq.s32.totalorder %s18, 1
    %p99 = scmp.ne.s32.totalorder %s94, %s96
    %p100 = scmp.eq.s32.totalorder %s18, 0
    %p101 = por %p99, %p100
    %p102 = scmp.ne.s32.totalorder %s94, %s96
    %p103 = scmp.eq.s32.totalorder %s23, 1
    %p104 = por %p102, %p103
    %p105 = scmp.ne.s32.totalorder %s96, %s97
    %p106 = scmp.eq.s32.totalorder %s23, 0
    %p107 = por %p105, %p106
    %p108 = scmp.ne.s32.totalorder %s96, %s97
    %p109 = scmp.eq.s32.totalorder %s24, 1
    %p110 = por %p108, %p109
    %p112 = scmp.ne.s32.totalorder %s97, %s111
    %p113 = scmp.eq.s32.totalorder %s24, 0
    %p114 = por %p112, %p113
    %s115 = ssub.s32 %s18, %s25
    %p116 = scmp.eq.s32.totalorder %s115, 0
    %s118 = sadd.s32 %s117, 1
    %s119 = scalar_select %p116, %s117, %s118
    %p122 = pneg %p116
    %p123 = scmp.eq.s32.totalorder %s18, 1
    %p124 = por %p122, %p123
    %p125 = scmp.ne.s32.totalorder %s117, %s120
    %p126 = scmp.eq.s32.totalorder %s18, 0
    %p127 = por %p125, %p126
    %p128 = scmp.ne.s32.totalorder %s117, %s120
    %p129 = scmp.eq.s32.totalorder %s23, 1
    %p130 = por %p128, %p129
    %p131 = scmp.ne.s32.totalorder %s120, %s121
    %p132 = scmp.eq.s32.totalorder %s23, 0
    %p133 = por %p131, %p132
    %p134 = scmp.ne.s32.totalorder %s120, %s121
    %p135 = scmp.eq.s32.totalorder %s24, 1
    %p136 = por %p134, %p135
    %p138 = scmp.ne.s32.totalorder %s121, %s137
    %p139 = scmp.eq.s32.totalorder %s24, 0
    %p140 = por %p138, %p139
    %s142 = sadd.s32 %s141, 1
    %p145 = scmp.eq.s32.totalorder %s18, 1
    %p146 = scmp.ne.s32.totalorder %s141, %s143
    %p147 = scmp.eq.s32.totalorder %s18, 0
    %p148 = por %p146, %p147
    %p149 = scmp.ne.s32.totalorder %s141, %s143
    %p150 = scmp.eq.s32.totalorder %s23, 1
    %p151 = por %p149, %p150
    %p152 = scmp.ne.s32.totalorder %s143, %s144
    %p153 = scmp.eq.s32.totalorder %s23, 0
    %p154 = por %p152, %p153
    %p155 = scmp.ne.s32.totalorder %s143, %s144
    %p156 = scmp.eq.s32.totalorder %s24, 1
    %p157 = por %p155, %p156
    %p159 = scmp.ne.s32.totalorder %s144, %s158
    %p160 = scmp.eq.s32.totalorder %s24, 0
    %p161 = por %p159, %p160
    %s162 = ssub.s32 %s18, %s25
    %p163 = scmp.eq.s32.totalorder %s162, 0
    %s165 = sadd.s32 %s164, 1
    %s166 = scalar_select %p163, %s164, %s165
    %p169 = pneg %p163
    %p170 = scmp.eq.s32.totalorder %s18, 1
    %p171 = por %p169, %p170
    %p172 = scmp.ne.s32.totalorder %s164, %s167
    %p173 = scmp.eq.s32.totalorder %s18, 0
    %p174 = por %p172, %p173
    %p175 = scmp.ne.s32.totalorder %s164, %s167
    %p176 = scmp.eq.s32.totalorder %s23, 1
    %p177 = por %p175, %p176
    %p178 = scmp.ne.s32.totalorder %s167, %s168
    %p179 = scmp.eq.s32.totalorder %s23, 0
    %p180 = por %p178, %p179
    %p181 = scmp.ne.s32.totalorder %s167, %s168
    %p182 = scmp.eq.s32.totalorder %s24, 1
    %p183 = por %p181, %p182
    %p185 = scmp.ne.s32.totalorder %s168, %s184
    %p186 = scmp.eq.s32.totalorder %s24, 0
    %p187 = por %p185, %p186
    %s188 = ssub.s32 %s18, %s25
    %p189 = scmp.eq.s32.totalorder %s188, 0
    %s191 = sadd.s32 %s190, 1
    %s192 = scalar_select %p189, %s190, %s191
    %p195 = pneg %p189
    %p196 = scmp.eq.s32.totalorder %s18, 1
    %p197 = por %p195, %p196
    %p198 = scmp.ne.s32.totalorder %s190, %s193
    %p199 = scmp.eq.s32.totalorder %s18, 0
    %p200 = por %p198, %p199
    %p201 = scmp.ne.s32.totalorder %s190, %s193
    %p202 = scmp.eq.s32.totalorder %s23, 1
    %p203 = por %p201, %p202
    %p204 = scmp.ne.s32.totalorder %s193, %s194
    %p205 = scmp.eq.s32.totalorder %s23, 0
    %p206 = por %p204, %p205
    %p207 = scmp.ne.s32.totalorder %s193, %s194
    %p208 = scmp.eq.s32.totalorder %s24, 1
    %p209 = por %p207, %p208
    %p211 = scmp.ne.s32.totalorder %s194, %s210
    %p212 = scmp.eq.s32.totalorder %s24, 0
    %p213 = por %p211, %p212
    %s214 = ssub.s32 %s18, %s25
    %p215 = scmp.eq.s32.totalorder %s214, 0
    %s217 = sadd.s32 %s216, 1
    %s218 = scalar_select %p215, %s216, %s217
    %p221 = pneg %p215
    %p222 = scmp.eq.s32.totalorder %s18, 1
    %p223 = por %p221, %p222
    %p224 = scmp.ne.s32.totalorder %s216, %s219
    %p225 = scmp.eq.s32.totalorder %s18, 0
    %p226 = por %p224, %p225
    %p227 = scmp.ne.s32.totalorder %s216, %s219
    %p228 = scmp.eq.s32.totalorder %s23, 1
    %p229 = por %p227, %p228
    %p230 = scmp.ne.s32.totalorder %s219, %s220
    %p231 = scmp.eq.s32.totalorder %s23, 0
    %p232 = por %p230, %p231
    %p233 = scmp.ne.s32.totalorder %s219, %s220
    %p234 = scmp.eq.s32.totalorder %s24, 1
    %p235 = por %p233, %p234
    %p237 = scmp.ne.s32.totalorder %s220, %s236
    %p238 = scmp.eq.s32.totalorder %s24, 0
    %p239 = por %p237, %p238
    %s240 = ssub.s32 %s18, %s25
    %p241 = scmp.eq.s32.totalorder %s240, 0
    %s243 = sadd.s32 %s242, 1
    %s244 = scalar_select %p241, %s242, %s243
    %p247 = pneg %p241
    %p248 = scmp.eq.s32.totalorder %s18, 1
    %p249 = por %p247, %p248
    %p250 = scmp.ne.s32.totalorder %s242, %s245
    %p251 = scmp.eq.s32.totalorder %s18, 0
    %p252 = por %p250, %p251
    %p253 = scmp.ne.s32.totalorder %s242, %s245
    %p254 = scmp.eq.s32.totalorder %s23, 1
    %p255 = por %p253, %p254
    %p256 = scmp.ne.s32.totalorder %s245, %s246
    %p257 = scmp.eq.s32.totalorder %s23, 0
    %p258 = por %p256, %p257
    %p259 = scmp.ne.s32.totalorder %s245, %s246
    %p260 = scmp.eq.s32.totalorder %s24, 1
    %p261 = por %p259, %p260
    %p263 = scmp.ne.s32.totalorder %s246, %s262
    %p264 = scmp.eq.s32.totalorder %s24, 0
    %p265 = por %p263, %p264
    %s266 = ssub.s32 %s18, %s25
    %p267 = scmp.eq.s32.totalorder %s266, 0
    %s269 = sadd.s32 %s268, 1
    %s270 = scalar_select %p267, %s268, %s269
    %p273 = pneg %p267
    %p274 = scmp.eq.s32.totalorder %s18, 1
    %p275 = por %p273, %p274
    %p276 = scmp.ne.s32.totalorder %s268, %s271
    %p277 = scmp.eq.s32.totalorder %s18, 0
    %p278 = por %p276, %p277
    %p279 = scmp.ne.s32.totalorder %s268, %s271
    %p280 = scmp.eq.s32.totalorder %s23, 1
    %p281 = por %p279, %p280
    %p282 = scmp.ne.s32.totalorder %s271, %s272
    %p283 = scmp.eq.s32.totalorder %s23, 0
    %p284 = por %p282, %p283
    %p285 = scmp.ne.s32.totalorder %s271, %s272
    %p286 = scmp.eq.s32.totalorder %s24, 1
    %p287 = por %p285, %p286
    %p289 = scmp.ne.s32.totalorder %s272, %s288
    %p290 = scmp.eq.s32.totalorder %s24, 0
    %p291 = por %p289, %p290
    %s292 = ssub.s32 %s18, %s25
    %p293 = scmp.eq.s32.totalorder %s292, 0
    %s295 = sadd.s32 %s294, 1
    %s296 = scalar_select %p293, %s294, %s295
    %p299 = pneg %p293
    %p300 = scmp.eq.s32.totalorder %s18, 1
    %p301 = por %p299, %p300
    %p302 = scmp.ne.s32.totalorder %s294, %s297
    %p303 = scmp.eq.s32.totalorder %s18, 0
    %p304 = por %p302, %p303
    %p305 = scmp.ne.s32.totalorder %s294, %s297
    %p306 = scmp.eq.s32.totalorder %s23, 1
    %p307 = por %p305, %p306
    %p308 = scmp.ne.s32.totalorder %s297, %s298
    %p309 = scmp.eq.s32.totalorder %s23, 0
    %p310 = por %p308, %p309
    %p311 = scmp.ne.s32.totalorder %s297, %s298
    %p312 = scmp.eq.s32.totalorder %s24, 1
    %p313 = por %p311, %p312
    %p315 = scmp.ne.s32.totalorder %s298, %s314
    %p316 = scmp.eq.s32.totalorder %s24, 0
    %p317 = por %p315, %p316
    %p318 = scmp.le.s32.totalorder 1, %s18
    %p319 = scmp.lt.s32.totalorder %s18, 3
    %p320 = pnand %p318, %p319
    %p321 = pneg %p320
    // Predicated region
    $region9: #{basic_block_forward.4} parent=5 // pred_check
      _
    $region10: #{basic_block_forward.4} parent=5 // pred_check_branch
      %323 = sbr.rel (%p320) target = $region12
    $region11: #{basic_block_forward.4} parent=5 // pred_region
      %s324 = ssub.s32 %s18, 1
      // Predicated region
      $region13: #{basic_block_forward.4} parent=11 // pred_check
        %p325 = pneg %p65
      $region14: #{basic_block_forward.4} parent=11 // pred_check_branch
        %327 = sbr.rel (%p325) target = $region16
      $region15: #{basic_block_forward.4} parent=11 // pred_region
        _
      $region16: #{basic_block_forward.4} parent=11 // pred_fallthru
        _
      // Predicated region
      $region17: #{basic_block_forward.4} parent=11 // pred_check
        %p328 = pneg %p86
      $region18: #{basic_block_forward.4} parent=11 // pred_check_branch
        %330 = sbr.rel (%p328) target = $region20
      $region19: #{basic_block_forward.4} parent=11 // pred_region
        _
      $region20: #{basic_block_forward.4} parent=11 // pred_fallthru
        _
      // Predicated region
      $region21: #{basic_block_forward.4} parent=11 // pred_check
        %p331 = pneg %p107
      $region22: #{basic_block_forward.4} parent=11 // pred_check_branch
        %333 = sbr.rel (%p331) target = $region24
      $region23: #{basic_block_forward.4} parent=11 // pred_region
        _
      $region24: #{basic_block_forward.4} parent=11 // pred_fallthru
        _
      // Predicated region
      $region25: #{basic_block_forward.4} parent=11 // pred_check
        %p334 = pneg %p154
      $region26: #{basic_block_forward.4} parent=11 // pred_check_branch
        %336 = sbr.rel (%p334) target = $region28
      $region27: #{basic_block_forward.4} parent=11 // pred_region
        _
      $region28: #{basic_block_forward.4} parent=11 // pred_fallthru
        _
    $region12: #{basic_block_forward.4} parent=5 // pred_fallthru
      _
    %p337 = scmp.lt.s32.totalorder %s18, 2
    // Predicated region
    $region29: #{basic_block_forward.4} parent=5 // pred_check
      %p338 = pneg %p337
    $region30: #{basic_block_forward.4} parent=5 // pred_check_branch
      %340 = sbr.rel (%p338) target = $region32
    $region31: #{basic_block_forward.4} parent=5 // pred_region
      // Predicated region
      $region33: #{basic_block_forward.4} parent=31 // pred_check
        %p341 = pneg %p38
      $region34: #{basic_block_forward.4} parent=31 // pred_check_branch
        %343 = sbr.rel (%p341) target = $region36
      $region35: #{basic_block_forward.4} parent=31 // pred_region
        %s344 = smul.u32 8, %s18
        %p345 = scmp.lt.s32.totalorder %s344, 15
        %s346 = scalar_select %p345, %s344, 15
        %s347 = smul.addr %s346, 4
        %s348 = scalar_lea.vmem %s0, %s347
        %s349 = smul.u32 8, %s18
      $region36: #{basic_block_forward.4} parent=31 // pred_fallthru
        _
      // Predicated region
      $region37: #{basic_block_forward.4} parent=31 // pred_check
        %p350 = pneg %p127
      $region38: #{basic_block_forward.4} parent=31 // pred_check_branch
        %352 = sbr.rel (%p350) target = $region40
      $region39: #{basic_block_forward.4} parent=31 // pred_region
        %s353 = smul.u32 8, %s18
        %p354 = scmp.lt.s32.totalorder %s353, 15
        %s355 = scalar_select %p354, %s353, 15
        %s356 = smul.addr %s355, 4
        %s357 = scalar_lea.vmem %s4, %s356
        %s358 = smul.u32 8, %s18
      $region40: #{basic_block_forward.4} parent=31 // pred_fallthru
        _
    $region32: #{basic_block_forward.4} parent=5 // pred_fallthru
      _
    %p359 = scmp.le.s32.totalorder 1, %s18
    %p360 = scmp.lt.s32.totalorder %s18, 3
    %p361 = pnand %p359, %p360
    %p362 = pneg %p361
    // Predicated region
    $region41: #{basic_block_forward.4} parent=5 // pred_check
      _
    $region42: #{basic_block_forward.4} parent=5 // pred_check_branch
      %364 = sbr.rel (%p361) target = $region44
    $region43: #{basic_block_forward.4} parent=5 // pred_region
      %s365 = ssub.s32 %s18, 1
      %s366 = smul.u32 8, %s23
      %p367 = scmp.lt.s32.totalorder %s366, 15
      %s368 = scalar_select %p367, %s366, 15
      %s369 = smul.addr %s368, 4
      %s370 = scalar_lea.vmem %s0, %s369
      %p371 = pneg %p44
      %p372 = pneg %p41
      %p373 = pneg %p65
      %p374 = pneg %p62
      %p375 = pneg %p86
      %p376 = pneg %p83
      %p377 = pneg %p107
      %p378 = pneg %p104
      %s379 = smul.u32 8, %s23
      %p380 = scmp.lt.s32.totalorder %s379, 15
      %s381 = scalar_select %p380, %s379, 15
      %s382 = smul.addr %s381, 4
      %s383 = scalar_lea.vmem %s4, %s382
      %p384 = pneg %p133
      %p385 = pneg %p130
      %p386 = pneg %p154
      %p387 = pneg %p151
      %p388 = pneg %p180
      %p389 = pneg %p177
      %s390 = smul.u32 8, %s23
      %p391 = scmp.lt.s32.totalorder %s390, 15
      %s392 = scalar_select %p391, %s390, 15
      %s393 = smul.addr %s392, 4
      %s394 = scalar_lea.vmem %s6, %s393
      %p395 = pneg %p206
      %p396 = pneg %p203
      %s397 = smul.u32 8, %s23
      %p398 = scmp.lt.s32.totalorder %s397, 15
      %s399 = scalar_select %p398, %s397, 15
      %s400 = smul.addr %s399, 4
      %s401 = scalar_lea.vmem %s7, %s400
      %p402 = pneg %p232
      %p403 = pneg %p229
      %p404 = scmp.lt.s32.totalorder %s23, 1
      %s405 = scalar_select %p404, %s23, 1
      %s406 = scalar_lea.vmem %s8, %s405
      %p407 = pneg %p258
      %p408 = pneg %p255
      %p409 = scmp.lt.s32.totalorder %s23, 1
      %s410 = scalar_select %p409, %s23, 1
      %s411 = scalar_lea.vmem %s9, %s410
      %p412 = pneg %p284
      %p413 = pneg %p281
      %p414 = scmp.lt.s32.totalorder %s23, 1
      %s415 = scalar_select %p414, %s23, 1
      %s416 = scalar_lea.vmem %s10, %s415
      %p417 = pneg %p310
      %p418 = pneg %p307
      %p419 = scmp.lt.s32.totalorder %s23, 1
      %s420 = scalar_select %p419, %s23, 1
      %s421 = scalar_lea.vmem %s11, %s420
      %s422 = smul.u32 8, %s23
      %p423 = scmp.lt.s32.totalorder %s422, 15
      %s424 = scalar_select %p423, %s422, 15
      %s425 = smul.addr %s424, 4
      %s426 = scalar_lea.vmem %s0, %s425
      %s427 = smul.u32 8, %s23
      %s428 = smul.u32 8, %s23
      %p429 = scmp.lt.s32.totalorder %s428, 15
      %s430 = scalar_select %p429, %s428, 15
      %s431 = smul.addr %s430, 4
      %s432 = scalar_lea.vmem %s4, %s431
      %s433 = smul.u32 8, %s23
      %s434 = smul.u32 8, %s23
      %p435 = scmp.lt.s32.totalorder %s434, 15
      %s436 = scalar_select %p435, %s434, 15
      %s437 = smul.addr %s436, 4
      %s438 = scalar_lea.vmem %s6, %s437
      %s439 = smul.u32 8, %s23
      %s440 = smul.u32 8, %s23
      %p441 = scmp.lt.s32.totalorder %s440, 15
      %s442 = scalar_select %p441, %s440, 15
      %s443 = smul.addr %s442, 4
      %s444 = scalar_lea.vmem %s7, %s443
      %s445 = smul.u32 8, %s23
      %p446 = scmp.lt.s32.totalorder %s23, 1
      %s447 = scalar_select %p446, %s23, 1
      %s448 = scalar_lea.vmem %s8, %s447
      %p449 = scmp.lt.s32.totalorder %s23, 1
      %s450 = scalar_select %p449, %s23, 1
      %s451 = scalar_lea.vmem %s9, %s450
      %p452 = scmp.lt.s32.totalorder %s23, 1
      %s453 = scalar_select %p452, %s23, 1
      %s454 = scalar_lea.vmem %s10, %s453
      %p455 = scmp.lt.s32.totalorder %s23, 1
      %s456 = scalar_select %p455, %s23, 1
      %s457 = scalar_lea.vmem %s11, %s456
      %v459 = vld [vmem:[%s426] sm:$0xf]
      %v460 = vld [vmem:[%s426 + $0x4] sm:$0xf]
      %v461 = vld [vmem:[%s426 + $0x8] sm:$0xf]
      %v462 = vld [vmem:[%s426 + $0xc] sm:$0xf]
      %v463 = vld [vmem:[%s426 + $0x10] sm:$0xf]
      %v464 = vld [vmem:[%s426 + $0x14] sm:$0xf]
      %v465 = vld [vmem:[%s426 + $0x18] sm:$0xf]
      %v466 = vld [vmem:[%s426 + $0x1c] sm:$0xf]
      %v467 = vunpack.c.l.bf16 %v459
      %v468 = vunpack.c.l.bf16 %v460
      %v469 = vunpack.c.l.bf16 %v461
      %v470 = vunpack.c.l.bf16 %v462
      %v471 = vunpack.c.l.bf16 %v463
      %v472 = vunpack.c.l.bf16 %v464
      %v473 = vunpack.c.l.bf16 %v465
      %v474 = vunpack.c.l.bf16 %v466
      %v475 = vld [vmem:[%s1] sm:$0x1]
      %v477 = vlaneseq
      %v478 = vshrl.u32 %v477, 7
      %v479 = vsub.s32 0, %v478
      %v480 = vrot.slane %v475, %v479
      %v482 = vmul.f32 %v467, %v480
      %v483 = vmul.f32 %v468, %v480
      %v484 = vmul.f32 %v469, %v480
      %v485 = vmul.f32 %v470, %v480
      %v486 = vmul.f32 %v471, %v480
      %v487 = vmul.f32 %v472, %v480
      %v488 = vmul.f32 %v473, %v480
      %v489 = vmul.f32 %v474, %v480
      %v490 = vld [vmem:[%s2] sm:$0x1]
      %v492 = vlaneseq
      %v493 = vshrl.u32 %v492, 7
      %v494 = vsub.s32 0, %v493
      %v495 = vrot.slane %v490, %v494
      %v497 = vadd.f32 %v482, %v495
      %v498 = vadd.f32 %v483, %v495
      %v499 = vadd.f32 %v484, %v495
      %v500 = vadd.f32 %v485, %v495
      %v501 = vadd.f32 %v486, %v495
      %v502 = vadd.f32 %v487, %v495
      %v503 = vadd.f32 %v488, %v495
      %v504 = vadd.f32 %v489, %v495
      %v505 = vmax.f32 %v497, 0.0
      %v506 = vmax.f32 %v498, 0.0
      %v507 = vmax.f32 %v499, 0.0
      %v508 = vmax.f32 %v500, 0.0
      %v509 = vmax.f32 %v501, 0.0
      %v510 = vmax.f32 %v502, 0.0
      %v511 = vmax.f32 %v503, 0.0
      %v512 = vmax.f32 %v504, 0.0
      %v513 = vlaneseq
      %v514 = vshrl.u32 %v513, 7
      %v515 = vadd.s32 %v514, 8
      %v516 = vadd.s32 %v514, 16
      %v517 = vadd.s32 %v514, 24
      %v518 = vadd.s32 %v514, 32
      %v519 = vadd.s32 %v514, 40
      %v520 = vadd.s32 %v514, 48
      %v521 = vadd.s32 %v514, 56
      %s522 = smul.u32 %s23, 64
      %v523 = vstv %s522
      %v524 = vadd.s32 %v514, %v523
      %v525 = vadd.s32 %v515, %v523
      %v526 = vadd.s32 %v516, %v523
      %v527 = vadd.s32 %v517, %v523
      %v528 = vadd.s32 %v518, %v523
      %v529 = vadd.s32 %v519, %v523
      %v530 = vadd.s32 %v520, %v523
      %v531 = vadd.s32 %v521, %v523
      %vm532 = vcmp.lt.s32.totalorder %v524, 128
      %vm533 = vcmp.lt.s32.totalorder %v525, 128
      %vm534 = vcmp.lt.s32.totalorder %v526, 128
      %vm535 = vcmp.lt.s32.totalorder %v527, 128
      %vm536 = vcmp.lt.s32.totalorder %v528, 128
      %vm537 = vcmp.lt.s32.totalorder %v529, 128
      %vm538 = vcmp.lt.s32.totalorder %v530, 128
      %vm539 = vcmp.lt.s32.totalorder %v531, 128
      %v540 = vsel %vm532, %v505, 0.0
      %v541 = vsel %vm533, %v506, 0.0
      %v542 = vsel %vm534, %v507, 0.0
      %v543 = vsel %vm535, %v508, 0.0
      %v544 = vsel %vm536, %v509, 0.0
      %v545 = vsel %vm537, %v510, 0.0
      %v546 = vsel %vm538, %v511, 0.0
      %v547 = vsel %vm539, %v512, 0.0
      %v548 = vpack.c.bf16 %v541, %v540
      %v549 = vpack.c.bf16 %v543, %v542
      %v550 = vpack.c.bf16 %v545, %v544
      %v551 = vpack.c.bf16 %v547, %v546
      %v552 = vld [vmem:[%s3] sm:$0xf]
      %v553 = vld [vmem:[%s3 + $0x4] sm:$0xf]
      %v554 = vld [vmem:[%s3 + $0x8] sm:$0xf]
      %v555 = vld [vmem:[%s3 + $0xc] sm:$0xf]
      %v556 = vld [vmem:[%s3 + $0x10] sm:$0xf]
      %v557 = vld [vmem:[%s3 + $0x14] sm:$0xf]
      %v558 = vld [vmem:[%s3 + $0x18] sm:$0xf]
      %v559 = vld [vmem:[%s3 + $0x1c] sm:$0xf]
      %v560 = vld [vmem:[%s3 + $0x20] sm:$0xf]
      %v561 = vld [vmem:[%s3 + $0x24] sm:$0xf]
      %v562 = vld [vmem:[%s3 + $0x28] sm:$0xf]
      %v563 = vld [vmem:[%s3 + $0x2c] sm:$0xf]
      %v564 = vld [vmem:[%s3 + $0x30] sm:$0xf]
      %v565 = vld [vmem:[%s3 + $0x34] sm:$0xf]
      %v566 = vld [vmem:[%s3 + $0x38] sm:$0xf]
      %v567 = vld [vmem:[%s3 + $0x3c] sm:$0xf]
      %v584 = vunpack.c.l.b16 %v552
      %v585 = vunpack.c.l.b16 %v553
      %v586 = vunpack.c.l.b16 %v554
      %v587 = vunpack.c.l.b16 %v555
      %v588 = vunpack.c.l.b16 %v556
      %v589 = vunpack.c.l.b16 %v557
      %v590 = vunpack.c.l.b16 %v558
      %v591 = vunpack.c.l.b16 %v559
      %v592 = vunpack.c.l.b16 %v560
      %v593 = vunpack.c.l.b16 %v561
      %v594 = vunpack.c.l.b16 %v562
      %v595 = vunpack.c.l.b16 %v563
      %v596 = vunpack.c.l.b16 %v564
      %v597 = vunpack.c.l.b16 %v565
      %v598 = vunpack.c.l.b16 %v566
      %v599 = vunpack.c.l.b16 %v567
      %v600 = vpack.c.b16 %v585, %v584
      %v601 = vpack.c.b16 %v587, %v586
      %v602 = vpack.c.b16 %v589, %v588
      %v603 = vpack.c.b16 %v591, %v590
      %v604 = vpack.c.b16 %v593, %v592
      %v605 = vpack.c.b16 %v595, %v594
      %v606 = vpack.c.b16 %v597, %v596
      %v607 = vpack.c.b16 %v599, %v598
      %616 = vmatprep.subr.bf16.mxu0 0
      %617 = vmatpush1.bf16.msra.mxu0 %v600
      %618 = vmatprep.subr.bf16.mxu0 0
      %619 = vmatpush1.bf16.msra.mxu0 %v601
      %620 = vmatprep.subr.bf16.mxu0 0
      %621 = vmatpush1.bf16.msra.mxu0 %v602
      %622 = vmatprep.subr.bf16.mxu0 0
      %623 = vmatpush1.bf16.msra.mxu0 %v603
      %624 = vmatprep.subr.bf16.mxu0 0
      %625 = vmatpush1.bf16.msra.mxu0 %v604
      %626 = vmatprep.subr.bf16.mxu0 0
      %627 = vmatpush1.bf16.msra.mxu0 %v605
      %628 = vmatprep.subr.bf16.mxu0 0
      %629 = vmatpush1.bf16.msra.mxu0 %v606
      %630 = vmatprep.subr.bf16.mxu0 0
      %631 = vmatpush1.bf16.msra.mxu0 %v607
      %632 = vmatprep.subr.bf16.mxu0 0
      %633 = vmatpush1.bf16.msra.mxu0 0
      %634 = vmatprep.subr.bf16.mxu0 0
      %635 = vmatpush1.bf16.msra.mxu0 0
      %636 = vmatprep.subr.bf16.mxu0 0
      %637 = vmatpush1.bf16.msra.mxu0 0
      %638 = vmatprep.subr.bf16.mxu0 0
      %639 = vmatpush1.bf16.msra.mxu0 0
      %640 = vmatprep.subr.bf16.mxu0 0
      %641 = vmatpush1.bf16.msra.mxu0 0
      %642 = vmatprep.subr.bf16.mxu0 0
      %643 = vmatpush1.bf16.msra.mxu0 0
      %644 = vmatprep.subr.bf16.mxu0 0
      %645 = vmatpush1.bf16.msra.mxu0 0
      %646 = vmatprep.subr.bf16.mxu0 0
      %647 = vmatpush1.bf16.msra.mxu0 0
      %648 = vmatprep.mubr.bf16.mxu0 0
      %649 = vmatmul.mubr.bf16.gmra.mrb[0].mxu0 %v548
      %v650 = vpop.f32.mrb[0].mxu0
      %v651 = vadd.f32 0.0, %v650
      %v652 = vpop.f32.mrb[0].mxu0
      %v653 = vpop.f32.mrb[0].mxu0
      %v654 = vadd.f32 0.0, %v653
      %v655 = vpop.f32.mrb[0].mxu0
      %656 = vmatprep.mubr.bf16.mxu0 0
      %657 = vmatmul.mubr.bf16.gmra.mrb[0].mxu0 %v549
      %v658 = vpop.f32.mrb[0].mxu0
      %v659 = vadd.f32 0.0, %v658
      %v660 = vpop.f32.mrb[0].mxu0
      %v661 = vpop.f32.mrb[0].mxu0
      %v662 = vadd.f32 0.0, %v661
      %v663 = vpop.f32.mrb[0].mxu0
      %664 = vmatprep.mubr.bf16.mxu0 0
      %665 = vmatmul.mubr.bf16.gmra.mrb[0].mxu0 %v550
      %v666 = vpop.f32.mrb[0].mxu0
      %v667 = vadd.f32 0.0, %v666
      %v668 = vpop.f32.mrb[0].mxu0
      %v669 = vpop.f32.mrb[0].mxu0
      %v670 = vadd.f32 0.0, %v669
      %v671 = vpop.f32.mrb[0].mxu0
      %672 = vmatprep.mubr.bf16.mxu0 0
      %673 = vmatmul.mubr.bf16.gmra.mrb[0].mxu0 %v551
      %v674 = vpop.f32.mrb[0].mxu0
      %v675 = vadd.f32 0.0, %v674
      %v676 = vpop.f32.mrb[0].mxu0
      %v677 = vpop.f32.mrb[0].mxu0
      %v678 = vadd.f32 0.0, %v677
      %v679 = vpop.f32.mrb[0].mxu0
      %680 = vdwg.mxu0
      %v681 = vpack.c.bf16 %v654, %v651
      %v682 = vpack.c.bf16 %v662, %v659
      %v683 = vpack.c.bf16 %v670, %v667
      %v684 = vpack.c.bf16 %v678, %v675
      %v689 = vunpack.c.l.b16 %v681
      %v690 = vunpack.c.h.b16 %v681
      %v691 = vunpack.c.l.b16 %v682
      %v692 = vunpack.c.h.b16 %v682
      %v693 = vunpack.c.l.b16 %v683
      %v694 = vunpack.c.h.b16 %v683
      %v695 = vunpack.c.l.b16 %v684
      %v696 = vunpack.c.h.b16 %v684
      %v697 = vpack.c.b16 %v689, %v689
      %v698 = vpack.c.b16 %v690, %v690
      %v699 = vpack.c.b16 %v691, %v691
      %v700 = vpack.c.b16 %v692, %v692
      %v701 = vpack.c.b16 %v693, %v693
      %v702 = vpack.c.b16 %v694, %v694
      %v703 = vpack.c.b16 %v695, %v695
      %v704 = vpack.c.b16 %v696, %v696
      %713 = vst [vmem:[%s438] sm:$0xf] %v697
      %714 = vst [vmem:[%s438 + $0x4] sm:$0xf] %v698
      %715 = vst [vmem:[%s438 + $0x8] sm:$0xf] %v699
      %716 = vst [vmem:[%s438 + $0xc] sm:$0xf] %v700
      %717 = vst [vmem:[%s438 + $0x10] sm:$0xf] %v701
      %718 = vst [vmem:[%s438 + $0x14] sm:$0xf] %v702
      %719 = vst [vmem:[%s438 + $0x18] sm:$0xf] %v703
      %720 = vst [vmem:[%s438 + $0x1c] sm:$0xf] %v704
      %v721 = vadd.f32 %v651, %v654
      %v722 = vadd.f32 %v721, %v659
      %v723 = vadd.f32 %v722, %v662
      %v724 = vadd.f32 %v723, %v667
      %v725 = vadd.f32 %v724, %v670
      %v726 = vadd.f32 %v725, %v675
      %v727 = vadd.f32 %v726, %v678
      %v728 = vrot.slane %v727, 4
      %v729 = vadd.f32 %v727, %v728
      %v730 = vrot.slane %v729, 2
      %v731 = vadd.f32 %v729, %v730
      %v732 = vrot.slane %v731, 1
      %v733 = vadd.f32 %v731, %v732
      %734 = vst [vmem:[%s448] sm:$0x1] %v733
      %v735 = vmul.f32 %v651, %v651
      %v736 = vmul.f32 %v654, %v654
      %v737 = vmul.f32 %v659, %v659
      %v738 = vmul.f32 %v662, %v662
      %v739 = vmul.f32 %v667, %v667
      %v740 = vmul.f32 %v670, %v670
      %v741 = vmul.f32 %v675, %v675
      %v742 = vmul.f32 %v678, %v678
      %v743 = vadd.f32 %v735, %v736
      %v744 = vadd.f32 %v743, %v737
      %v745 = vadd.f32 %v744, %v738
      %v746 = vadd.f32 %v745, %v739
      %v747 = vadd.f32 %v746, %v740
      %v748 = vadd.f32 %v747, %v741
      %v749 = vadd.f32 %v748, %v742
      %v750 = vrot.slane %v749, 4
      %v751 = vadd.f32 %v749, %v750
      %v752 = vrot.slane %v751, 2
      %v753 = vadd.f32 %v751, %v752
      %v754 = vrot.slane %v753, 1
      %v755 = vadd.f32 %v753, %v754
      %756 = vst [vmem:[%s451] sm:$0x1] %v755
      %v757 = vld [vmem:[%s432] sm:$0xf]
      %v758 = vld [vmem:[%s432 + $0x4] sm:$0xf]
      %v759 = vld [vmem:[%s432 + $0x8] sm:$0xf]
      %v760 = vld [vmem:[%s432 + $0xc] sm:$0xf]
      %v761 = vld [vmem:[%s432 + $0x10] sm:$0xf]
      %v762 = vld [vmem:[%s432 + $0x14] sm:$0xf]
      %v763 = vld [vmem:[%s432 + $0x18] sm:$0xf]
      %v764 = vld [vmem:[%s432 + $0x1c] sm:$0xf]
      %v765 = vld [vmem:[%s5] sm:$0xf]
      %v766 = vld [vmem:[%s5 + $0x4] sm:$0xf]
      %v767 = vld [vmem:[%s5 + $0x8] sm:$0xf]
      %v768 = vld [vmem:[%s5 + $0xc] sm:$0xf]
      %v769 = vld [vmem:[%s5 + $0x10] sm:$0xf]
      %v770 = vld [vmem:[%s5 + $0x14] sm:$0xf]
      %v771 = vld [vmem:[%s5 + $0x18] sm:$0xf]
      %v772 = vld [vmem:[%s5 + $0x1c] sm:$0xf]
      %v773 = vld [vmem:[%s5 + $0x20] sm:$0xf]
      %v774 = vld [vmem:[%s5 + $0x24] sm:$0xf]
      %v775 = vld [vmem:[%s5 + $0x28] sm:$0xf]
      %v776 = vld [vmem:[%s5 + $0x2c] sm:$0xf]
      %v777 = vld [vmem:[%s5 + $0x30] sm:$0xf]
      %v778 = vld [vmem:[%s5 + $0x34] sm:$0xf]
      %v779 = vld [vmem:[%s5 + $0x38] sm:$0xf]
      %v780 = vld [vmem:[%s5 + $0x3c] sm:$0xf]
      %v789 = vunpack.c.l.b16 %v757
      %v790 = vunpack.c.l.b16 %v758
      %v791 = vunpack.c.l.b16 %v759
      %v792 = vunpack.c.l.b16 %v760
      %v793 = vunpack.c.l.b16 %v761
      %v794 = vunpack.c.l.b16 %v762
      %v795 = vunpack.c.l.b16 %v763
      %v796 = vunpack.c.l.b16 %v764
      %v797 = vpack.c.b16 %v790, %v789
      %v798 = vpack.c.b16 %v792, %v791
      %v799 = vpack.c.b16 %v794, %v793
      %v800 = vpack.c.b16 %v796, %v795
      %v821 = vunpack.c.l.b16 %v765
      %v822 = vunpack.c.l.b16 %v766
      %v823 = vunpack.c.l.b16 %v767
      %v824 = vunpack.c.l.b16 %v768
      %v825 = vunpack.c.l.b16 %v769
      %v826 = vunpack.c.l.b16 %v770
      %v827 = vunpack.c.l.b16 %v771
      %v828 = vunpack.c.l.b16 %v772
      %v829 = vunpack.c.l.b16 %v773
      %v830 = vunpack.c.l.b16 %v774
      %v831 = vunpack.c.l.b16 %v775
      %v832 = vunpack.c.l.b16 %v776
      %v833 = vunpack.c.l.b16 %v777
      %v834 = vunpack.c.l.b16 %v778
      %v835 = vunpack.c.l.b16 %v779
      %v836 = vunpack.c.l.b16 %v780
      %v837 = vpack.c.b16 %v822, %v821
      %v838 = vpack.c.b16 %v824, %v823
      %v839 = vpack.c.b16 %v826, %v825
      %v840 = vpack.c.b16 %v828, %v827
      %v841 = vpack.c.b16 %v830, %v829
      %v842 = vpack.c.b16 %v832, %v831
      %v843 = vpack.c.b16 %v834, %v833
      %v844 = vpack.c.b16 %v836, %v835
      %853 = vmatprep.subr.bf16.mxu0 0
      %854 = vmatpush1.bf16.msra.mxu0 %v837
      %855 = vmatprep.subr.bf16.mxu0 0
      %856 = vmatpush1.bf16.msra.mxu0 %v838
      %857 = vmatprep.subr.bf16.mxu0 0
      %858 = vmatpush1.bf16.msra.mxu0 %v839
      %859 = vmatprep.subr.bf16.mxu0 0
      %860 = vmatpush1.bf16.msra.mxu0 %v840
      %861 = vmatprep.subr.bf16.mxu0 0
      %862 = vmatpush1.bf16.msra.mxu0 %v841
      %863 = vmatprep.subr.bf16.mxu0 0
      %864 = vmatpush1.bf16.msra.mxu0 %v842
      %865 = vmatprep.subr.bf16.mxu0 0
      %866 = vmatpush1.bf16.msra.mxu0 %v843
      %867 = vmatprep.subr.bf16.mxu0 0
      %868 = vmatpush1.bf16.msra.mxu0 %v844
      %869 = vmatprep.subr.bf16.mxu0 0
      %870 = vmatpush1.bf16.msra.mxu0 0
      %871 = vmatprep.subr.bf16.mxu0 0
      %872 = vmatpush1.bf16.msra.mxu0 0
      %873 = vmatprep.subr.bf16.mxu0 0
      %874 = vmatpush1.bf16.msra.mxu0 0
      %875 = vmatprep.subr.bf16.mxu0 0
      %876 = vmatpush1.bf16.msra.mxu0 0
      %877 = vmatprep.subr.bf16.mxu0 0
      %878 = vmatpush1.bf16.msra.mxu0 0
      %879 = vmatprep.subr.bf16.mxu0 0
      %880 = vmatpush1.bf16.msra.mxu0 0
      %881 = vmatprep.subr.bf16.mxu0 0
      %882 = vmatpush1.bf16.msra.mxu0 0
      %883 = vmatprep.subr.bf16.mxu0 0
      %884 = vmatpush1.bf16.msra.mxu0 0
      %885 = vmatprep.mubr.bf16.mxu0 0
      %886 = vmatmul.mubr.bf16.gmra.mrb[0].mxu0 %v797
      %v887 = vpop.f32.mrb[0].mxu0
      %v888 = vadd.f32 0.0, %v887
      %v889 = vpop.f32.mrb[0].mxu0
      %v890 = vpop.f32.mrb[0].mxu0
      %v891 = vadd.f32 0.0, %v890
      %v892 = vpop.f32.mrb[0].mxu0
      %893 = vmatprep.mubr.bf16.mxu0 0
      %894 = vmatmul.mubr.bf16.gmra.mrb[0].mxu0 %v798
      %v895 = vpop.f32.mrb[0].mxu0
      %v896 = vadd.f32 0.0, %v895
      %v897 = vpop.f32.mrb[0].mxu0
      %v898 = vpop.f32.mrb[0].mxu0
      %v899 = vadd.f32 0.0, %v898
      %v900 = vpop.f32.mrb[0].mxu0
      %901 = vmatprep.mubr.bf16.mxu0 0
      %902 = vmatmul.mubr.bf16.gmra.mrb[0].mxu0 %v799
      %v903 = vpop.f32.mrb[0].mxu0
      %v904 = vadd.f32 0.0, %v903
      %v905 = vpop.f32.mrb[0].mxu0
      %v906 = vpop.f32.mrb[0].mxu0
      %v907 = vadd.f32 0.0, %v906
      %v908 = vpop.f32.mrb[0].mxu0
      %909 = vmatprep.mubr.bf16.mxu0 0
      %910 = vmatmul.mubr.bf16.gmra.mrb[0].mxu0 %v800
      %v911 = vpop.f32.mrb[0].mxu0
      %v912 = vadd.f32 0.0, %v911
      %v913 = vpop.f32.mrb[0].mxu0
      %v914 = vpop.f32.mrb[0].mxu0
      %v915 = vadd.f32 0.0, %v914
      %v916 = vpop.f32.mrb[0].mxu0
      %917 = vdwg.mxu0
      %v918 = vpack.c.bf16 %v891, %v888
      %v919 = vpack.c.bf16 %v899, %v896
      %v920 = vpack.c.bf16 %v907, %v904
      %v921 = vpack.c.bf16 %v915, %v912
      %v926 = vunpack.c.l.b16 %v918
      %v927 = vunpack.c.h.b16 %v918
      %v928 = vunpack.c.l.b16 %v919
      %v929 = vunpack.c.h.b16 %v919
      %v930 = vunpack.c.l.b16 %v920
      %v931 = vunpack.c.h.b16 %v920
      %v932 = vunpack.c.l.b16 %v921
      %v933 = vunpack.c.h.b16 %v921
      %v934 = vpack.c.b16 %v926, %v926
      %v935 = vpack.c.b16 %v927, %v927
      %v936 = vpack.c.b16 %v928, %v928
      %v937 = vpack.c.b16 %v929, %v929
      %v938 = vpack.c.b16 %v930, %v930
      %v939 = vpack.c.b16 %v931, %v931
      %v940 = vpack.c.b16 %v932, %v932
      %v941 = vpack.c.b16 %v933, %v933
      %950 = vst [vmem:[%s444] sm:$0xf] %v934
      %951 = vst [vmem:[%s444 + $0x4] sm:$0xf] %v935
      %952 = vst [vmem:[%s444 + $0x8] sm:$0xf] %v936
      %953 = vst [vmem:[%s444 + $0xc] sm:$0xf] %v937
      %954 = vst [vmem:[%s444 + $0x10] sm:$0xf] %v938
      %955 = vst [vmem:[%s444 + $0x14] sm:$0xf] %v939
      %956 = vst [vmem:[%s444 + $0x18] sm:$0xf] %v940
      %957 = vst [vmem:[%s444 + $0x1c] sm:$0xf] %v941
      %v958 = vadd.f32 %v888, %v891
      %v959 = vadd.f32 %v958, %v896
      %v960 = vadd.f32 %v959, %v899
      %v961 = vadd.f32 %v960, %v904
      %v962 = vadd.f32 %v961, %v907
      %v963 = vadd.f32 %v962, %v912
      %v964 = vadd.f32 %v963, %v915
      %v965 = vrot.slane %v964, 4
      %v966 = vadd.f32 %v964, %v965
      %v967 = vrot.slane %v966, 2
      %v968 = vadd.f32 %v966, %v967
      %v969 = vrot.slane %v968, 1
      %v970 = vadd.f32 %v968, %v969
      %971 = vst [vmem:[%s454] sm:$0x1] %v970
      %v972 = vmul.f32 %v888, %v888
      %v973 = vmul.f32 %v891, %v891
      %v974 = vmul.f32 %v896, %v896
      %v975 = vmul.f32 %v899, %v899
      %v976 = vmul.f32 %v904, %v904
      %v977 = vmul.f32 %v907, %v907
      %v978 = vmul.f32 %v912, %v912
      %v979 = vmul.f32 %v915, %v915
      %v980 = vadd.f32 %v972, %v973
      %v981 = vadd.f32 %v980, %v974
      %v982 = vadd.f32 %v981, %v975
      %v983 = vadd.f32 %v982, %v976
      %v984 = vadd.f32 %v983, %v977
      %v985 = vadd.f32 %v984, %v978
      %v986 = vadd.f32 %v985, %v979
      %v987 = vrot.slane %v986, 4
      %v988 = vadd.f32 %v986, %v987
      %v989 = vrot.slane %v988, 2
      %v990 = vadd.f32 %v988, %v989
      %v991 = vrot.slane %v990, 1
      %v992 = vadd.f32 %v990, %v991
      %993 = vst [vmem:[%s457] sm:$0x1] %v992
      %s994 = smul.u32 8, %s23
      %p995 = scmp.lt.s32.totalorder %s994, 15
      %s996 = scalar_select %p995, %s994, 15
      %s997 = smul.addr %s996, 4
      %s998 = scalar_lea.vmem %s6, %s997
      %s999 = smul.u32 8, %s23
      %p1000 = scmp.lt.s32.totalorder %s999, 15
      %s1001 = scalar_select %p1000, %s999, 15
      %s1002 = smul.addr %s1001, 4
      %s1003 = scalar_lea.vmem %s7, %s1002
      %p1004 = scmp.lt.s32.totalorder %s23, 1
      %s1005 = scalar_select %p1004, %s23, 1
      %s1006 = scalar_lea.vmem %s8, %s1005
      %p1007 = scmp.lt.s32.totalorder %s23, 1
      %s1008 = scalar_select %p1007, %s23, 1
      %s1009 = scalar_lea.vmem %s9, %s1008
      %p1010 = scmp.lt.s32.totalorder %s23, 1
      %s1011 = scalar_select %p1010, %s23, 1
      %s1012 = scalar_lea.vmem %s10, %s1011
      %p1013 = scmp.lt.s32.totalorder %s23, 1
      %s1014 = scalar_select %p1013, %s23, 1
      %s1015 = scalar_lea.vmem %s11, %s1014
      // Predicated region
      $region45: #{basic_block_forward.4} parent=43 // pred_check
        %p1016 = pneg %p177
      $region46: #{basic_block_forward.4} parent=43 // pred_check_branch
        %1018 = sbr.rel (%p1016) target = $region48
      $region47: #{basic_block_forward.4} parent=43 // pred_region
        %s1019 = smul.u32 8, %s23
      $region48: #{basic_block_forward.4} parent=43 // pred_fallthru
        _
      // Predicated region
      $region49: #{basic_block_forward.4} parent=43 // pred_check
        %p1020 = pneg %p203
      $region50: #{basic_block_forward.4} parent=43 // pred_check_branch
        %1022 = sbr.rel (%p1020) target = $region52
      $region51: #{basic_block_forward.4} parent=43 // pred_region
        %s1023 = smul.u32 8, %s23
      $region52: #{basic_block_forward.4} parent=43 // pred_fallthru
        _
      // Predicated region
      $region53: #{basic_block_forward.4} parent=43 // pred_check
        %p1024 = pneg %p229
      $region54: #{basic_block_forward.4} parent=43 // pred_check_branch
        %1026 = sbr.rel (%p1024) target = $region56
      $region55: #{basic_block_forward.4} parent=43 // pred_region
        _
      $region56: #{basic_block_forward.4} parent=43 // pred_fallthru
        _
      // Predicated region
      $region57: #{basic_block_forward.4} parent=43 // pred_check
        %p1027 = pneg %p255
      $region58: #{basic_block_forward.4} parent=43 // pred_check_branch
        %1029 = sbr.rel (%p1027) target = $region60
      $region59: #{basic_block_forward.4} parent=43 // pred_region
        _
      $region60: #{basic_block_forward.4} parent=43 // pred_fallthru
        _
      // Predicated region
      $region61: #{basic_block_forward.4} parent=43 // pred_check
        %p1030 = pneg %p281
      $region62: #{basic_block_forward.4} parent=43 // pred_check_branch
        %1032 = sbr.rel (%p1030) target = $region64
      $region63: #{basic_block_forward.4} parent=43 // pred_region
        _
      $region64: #{basic_block_forward.4} parent=43 // pred_fallthru
        _
      // Predicated region
      $region65: #{basic_block_forward.4} parent=43 // pred_check
        %p1033 = pneg %p307
      $region66: #{basic_block_forward.4} parent=43 // pred_check_branch
        %1035 = sbr.rel (%p1033) target = $region68
      $region67: #{basic_block_forward.4} parent=43 // pred_region
        _
      $region68: #{basic_block_forward.4} parent=43 // pred_fallthru
        _
    $region44: #{basic_block_forward.4} parent=5 // pred_fallthru
      _
    %p1036 = scmp.le.s32.totalorder 2, %s18
    // Predicated region
    $region69: #{basic_block_forward.4} parent=5 // pred_check
      %p1037 = pneg %p1036
    $region70: #{basic_block_forward.4} parent=5 // pred_check_branch
      %1039 = sbr.rel (%p1037) target = $region72
    $region71: #{basic_block_forward.4} parent=5 // pred_region
      %s1040 = ssub.s32 %s18, 2
      // Predicated region
      $region73: #{basic_block_forward.4} parent=71 // pred_check
        %p1041 = pneg %p183
      $region74: #{basic_block_forward.4} parent=71 // pred_check_branch
        %1043 = sbr.rel (%p1041) target = $region76
      $region75: #{basic_block_forward.4} parent=71 // pred_region
        %s1044 = smul.u32 8, %s24
        %p1045 = scmp.lt.s32.totalorder %s1044, 15
        %s1046 = scalar_select %p1045, %s1044, 15
        %s1047 = smul.addr %s1046, 4
        %s1048 = scalar_lea.vmem %s6, %s1047
      $region76: #{basic_block_forward.4} parent=71 // pred_fallthru
        _
      // Predicated region
      $region77: #{basic_block_forward.4} parent=71 // pred_check
        %p1049 = pneg %p209
      $region78: #{basic_block_forward.4} parent=71 // pred_check_branch
        %1051 = sbr.rel (%p1049) target = $region80
      $region79: #{basic_block_forward.4} parent=71 // pred_region
        %s1052 = smul.u32 8, %s24
        %p1053 = scmp.lt.s32.totalorder %s1052, 15
        %s1054 = scalar_select %p1053, %s1052, 15
        %s1055 = smul.addr %s1054, 4
        %s1056 = scalar_lea.vmem %s7, %s1055
      $region80: #{basic_block_forward.4} parent=71 // pred_fallthru
        _
      // Predicated region
      $region81: #{basic_block_forward.4} parent=71 // pred_check
        %p1057 = pneg %p235
      $region82: #{basic_block_forward.4} parent=71 // pred_check_branch
        %1059 = sbr.rel (%p1057) target = $region84
      $region83: #{basic_block_forward.4} parent=71 // pred_region
        %p1060 = scmp.lt.s32.totalorder %s24, 1
        %s1061 = scalar_select %p1060, %s24, 1
        %s1062 = scalar_lea.vmem %s8, %s1061
      $region84: #{basic_block_forward.4} parent=71 // pred_fallthru
        _
      // Predicated region
      $region85: #{basic_block_forward.4} parent=71 // pred_check
        %p1063 = pneg %p261
      $region86: #{basic_block_forward.4} parent=71 // pred_check_branch
        %1065 = sbr.rel (%p1063) target = $region88
      $region87: #{basic_block_forward.4} parent=71 // pred_region
        %p1066 = scmp.lt.s32.totalorder %s24, 1
        %s1067 = scalar_select %p1066, %s24, 1
        %s1068 = scalar_lea.vmem %s9, %s1067
      $region88: #{basic_block_forward.4} parent=71 // pred_fallthru
        _
      // Predicated region
      $region89: #{basic_block_forward.4} parent=71 // pred_check
        %p1069 = pneg %p287
      $region90: #{basic_block_forward.4} parent=71 // pred_check_branch
        %1071 = sbr.rel (%p1069) target = $region92
      $region91: #{basic_block_forward.4} parent=71 // pred_region
        %p1072 = scmp.lt.s32.totalorder %s24, 1
        %s1073 = scalar_select %p1072, %s24, 1
        %s1074 = scalar_lea.vmem %s10, %s1073
      $region92: #{basic_block_forward.4} parent=71 // pred_fallthru
        _
      // Predicated region
      $region93: #{basic_block_forward.4} parent=71 // pred_check
        %p1075 = pneg %p313
      $region94: #{basic_block_forward.4} parent=71 // pred_check_branch
        %1077 = sbr.rel (%p1075) target = $region96
      $region95: #{basic_block_forward.4} parent=71 // pred_region
        %p1078 = scmp.lt.s32.totalorder %s24, 1
        %s1079 = scalar_select %p1078, %s24, 1
        %s1080 = scalar_lea.vmem %s11, %s1079
      $region96: #{basic_block_forward.4} parent=71 // pred_fallthru
        _
    $region72: #{basic_block_forward.4} parent=5 // pred_fallthru
      _
  $region6: #{basic_block_forward.4} parent=0 // loop_footer
    %s22 = sadd.s32 1, %s18
  $region7: #{basic_block_forward.4} parent=0 // loop_footer_branch
    %17 = sbr.rel target = $region3
  $region8: #{basic_block_forward.4} parent=0 // loop_exit
    _

</llo_original>
